<compile_context>
chip_gen: v6e
topology: v6e:2x2x1
jax: 0.10.0
libtpu: 0.0.40
codegen_flags: <defaults>
</compile_context>

<pallas_src>
import jax
import jax.numpy as jnp
from jax.experimental import pallas as pl
from jax.experimental.pallas import tpu as pltpu
from jax.scipy.linalg import block_diag

LATENT_DIM = 32       # laten_code_dim in the reference code
OH1, OW1 = 15, 7      # conv1 output spatial for a (64, 32) input, k=8, s=4
OH1P = 16             # conv1 rows padded to a whole number of sublane tiles
OH2, OW2 = 12, 4      # conv2 output spatial, k=4, s=1
C1, C2 = 8, 16        # conv1 / conv2 output channels
K1 = OW1 * 64         # conv1 contraction width per row (448); Mosaic pads K itself
N1 = OW1 * C1         # 56  : y1 lane width  [ow1*8 + c1]
N2 = OW2 * C2         # 64  : y2 lane width  [ow2*16 + c2]
KLIN = OH2 * N2       # 768 : lin1 contraction width


# ------------------------------ Pallas kernel --------------------------------
def _encoder_kernel(p1_ref, w1_ref, b1_ref, w2_ref, b2_ref, w3_ref, b3_ref,
                    o_ref, y1_s, y2_s):
    bt16 = y2_s.shape[0]          # B_TILE * 16  (16 padded rows per image)
    b_tile = o_ref.shape[0]       # B_TILE

    # ---- conv1 + ReLU: one (16*B_TILE, 448) @ (448, 56) matmul -----------------
    # y1 row layout: [b*16 + oh1], lane layout: [ow1*8 + c1]
    y1 = jnp.dot(p1_ref[...], w1_ref[...], preferred_element_type=jnp.float32)
    y1_s[:bt16, :] = jnp.maximum(y1 + b1_ref[...], 0.0)
    # zero the 8 spare tail rows so the ky-shifted slices below never read garbage
    y1_s[bt16:, :] = jnp.zeros((y1_s.shape[0] - bt16, y1_s.shape[1]), jnp.float32)

    # ---- conv2 + ReLU: 4 row-shifted matmuls (one per ky tap) ------------------
    # kx is folded into the (56, 64) embedded weights, so the LHS is always the
    # full-lane y1 tile shifted by ky rows.  Per-image rows 12..15 of the result
    # are junk (they mix images / padding) and are never read afterwards.
    taps = [jnp.dot(y1_s[ky:ky + bt16, :], w2_ref[ky],
                    preferred_element_type=jnp.float32) for ky in range(4)]
    acc = (taps[0] + taps[1]) + (taps[2] + taps[3])
    y2_s[...] = jnp.maximum(acc + b2_ref[...], 0.0)       # [b*16 + oh2, ow2*16 + c2]

    # ---- lin1 + sigmoid: gather 12 valid rows per image -> one batched matmul --
    # stride-16 sublane slices pick row r of every image in the tile.
    flat = jnp.concatenate(
        [y2_s[pl.ds(r, b_tile, stride=16), :] for r in range(OH2)], axis=-1)
    z = jnp.dot(flat, w3_ref[...], preferred_element_type=jnp.float32) + b3_ref[...]
    o_ref[...] = pl.reciprocal(1.0 + jnp.exp(-z), approx=True)   # sigmoid on EUP


# ------------------------------- JAX wrapper ----------------------------------
def encoder_forward(x, params, *, b_tile=None):
    """Fused Pallas implementation of Encoder.forward (batched image tiles)."""
    B = x.shape[0]
    f32 = jnp.float32
    x = x.astype(f32)

    if b_tile is None:
        # >=2 grid steps as soon as B > 8 (keeps both v7x TensorCores busy);
        # tunable up to ~32 for very large batches.
        b_tile = 8 if B <= 16 else 16
    num_steps = pl.cdiv(B, b_tile)
    b_pad = num_steps * b_tile

    # conv1 im2col: one XLA patches op -> (B, 15, 7, 64), feature order (ky, kx)
    # (C_in == 1).  Pad each image to 16 rows and the batch to a multiple of
    # b_tile, then flatten to the kernel's 2-D (rows-in-sublanes) layout.
    patches = jax.lax.conv_general_dilated_patches(
        x, filter_shape=(8, 8), window_strides=(4, 4), padding="VALID",
        dimension_numbers=("NCHW", "OIHW", "NHWC"))
    p1 = patches.reshape(B, OH1, K1)                                   # (B, 15, 448)
    p1 = jnp.pad(p1, ((0, b_pad - B), (0, OH1P - OH1), (0, 0)))        # (b_pad, 16, 448)
    p1 = p1.reshape(b_pad * OH1P, K1)                                  # (b_pad*16, 448)

    # --- statically transformed weights (all layout permutations live here) ---
    # conv1: block-diagonal weights so one matmul directly yields [oh1, ow1*8+c1].
    w1r = params["w1"].astype(f32).reshape(C1, 64).T                   # (64, 8)
    w1blk = block_diag(*([w1r] * OW1))                                 # (448, 56)
    b1w = jnp.tile(params["b1"].astype(f32), OW1).reshape(1, N1)

    # conv2: one (56, 64) matrix per ky tap, with every kx tap embedded at row
    # offset 8*kx (so W2e[ky][ow1*8 + c1, ow2*16 + c2] = w2[c2, c1, ky, ow1-ow2]).
    w2 = params["w2"].astype(f32)                                      # (16, 8, 4, 4)
    w2e = jnp.zeros((4, N1, N2), f32)
    for ky in range(4):
        for kx in range(4):
            blk = block_diag(*([w2[:, :, ky, kx].T] * OW2))            # (32, 64)
            w2e = w2e.at[ky, 8 * kx:8 * kx + 32, :].add(blk)
    b2w = jnp.tile(params["b2"].astype(f32), OW2).reshape(1, N2)

    # lin1: permute rows from PyTorch NCHW flatten order (c2, oh2, ow2) to the
    # kernel's gathered-y2 order (oh2, ow2, c2).
    w3s = (params["w3"].astype(f32).reshape(LATENT_DIM, C2, OH2, OW2)
           .transpose(2, 3, 1, 0).reshape(KLIN, LATENT_DIM))           # (768, 32)
    b3r = params["b3"].astype(f32).reshape(1, LATENT_DIM)

    out = pl.pallas_call(
        _encoder_kernel,
        out_shape=jax.ShapeDtypeStruct((b_pad, LATENT_DIM), f32),
        grid=(num_steps,),
        in_specs=[
            pl.BlockSpec((b_tile * OH1P, K1), lambda i: (i, 0)),       # patches tile
            pl.BlockSpec((K1, N1), lambda i: (0, 0)),                  # conv1 W
            pl.BlockSpec((1, N1), lambda i: (0, 0)),                   # conv1 b
            pl.BlockSpec((4, N1, N2), lambda i: (0, 0, 0)),            # conv2 W (per ky)
            pl.BlockSpec((1, N2), lambda i: (0, 0)),                   # conv2 b
            pl.BlockSpec((KLIN, LATENT_DIM), lambda i: (0, 0)),        # lin1 W
            pl.BlockSpec((1, LATENT_DIM), lambda i: (0, 0)),           # lin1 b
        ],
        out_specs=pl.BlockSpec((b_tile, LATENT_DIM), lambda i: (i, 0)),
        scratch_shapes=[
            pltpu.VMEM((b_tile * OH1P + 8, N1), f32),   # y1 (+8 tail rows for ky shifts)
            pltpu.VMEM((b_tile * OH1P, N2), f32),       # y2 (16 rows / image, 12 valid)
        ],
        compiler_params=pltpu.CompilerParams(
            dimension_semantics=("parallel",)),
    )(p1, w1blk, b1w, w2e, b2w, w3s, b3r)
    return out[:B]


# ----------------------- deterministic parameter init -------------------------
def init_params(key):
    ks = jax.random.split(key, 6)
    s = 0.05
    return {
        "w1": s * jax.random.normal(ks[0], (8, 1, 8, 8), jnp.float32),     # conv1.weight
        "b1": s * jax.random.normal(ks[1], (8,), jnp.float32),             # conv1.bias
        "w2": s * jax.random.normal(ks[2], (16, 8, 4, 4), jnp.float32),    # conv2.weight
        "b2": s * jax.random.normal(ks[3], (16,), jnp.float32),            # conv2.bias
        "w3": s * jax.random.normal(ks[4], (LATENT_DIM, 768), jnp.float32),  # lin1.weight
        "b3": s * jax.random.normal(ks[5], (LATENT_DIM,), jnp.float32),    # lin1.bias
    }


# ---------------------------- pure-JAX reference -------------------------------
def encoder_reference(x, params):
    dn1 = jax.lax.conv_dimension_numbers(x.shape, params["w1"].shape, ("NCHW", "OIHW", "NCHW"))
    y = jax.lax.conv_general_dilated(x, params["w1"], (4, 4), "VALID", dimension_numbers=dn1)
    y = jax.nn.relu(y + params["b1"][None, :, None, None])
    dn2 = jax.lax.conv_dimension_numbers(y.shape, params["w2"].shape, ("NCHW", "OIHW", "NCHW"))
    y = jax.lax.conv_general_dilated(y, params["w2"], (1, 1), "VALID", dimension_numbers=dn2)
    y = jax.nn.relu(y + params["b2"][None, :, None, None])
    flat = y.reshape(y.shape[0], -1)
    return jax.nn.sigmoid(flat @ params["w3"].T + params["b3"][None, :])


if __name__ == "__main__":
    key = jax.random.PRNGKey(0)
    kx_, kp = jax.random.split(key)

    # Input consistent with Encoder(D_in=198): (198 - 6)//4 * 16 == 768 == 16*12*4.
    x = jax.random.uniform(kx_, (2, 1, 64, 32), jnp.float32)
    params = init_params(kp)

    enc = jax.jit(encoder_forward)(x, params)
    enc = jax.block_until_ready(enc)

    ref = encoder_reference(x, params)
    assert enc.shape == (2, LATENT_DIM), enc.shape
    assert bool(jnp.all(jnp.isfinite(enc)))
    assert bool(jnp.allclose(enc, ref, atol=1e-2, rtol=1e-2)), float(jnp.max(jnp.abs(enc - ref)))

    print("KERNEL_OK")
</pallas_src>

<mosaic_0001>
module attributes {stable_mosaic.version = 11 : i64} {
  func.func @_encoder_kernel(%arg0: i32, %arg1: memref<128x448xf32, #tpu.memory_space<vmem>>, %arg2: memref<448x56xf32, #tpu.memory_space<vmem>>, %arg3: memref<1x56xf32, #tpu.memory_space<vmem>>, %arg4: memref<4x56x64xf32, #tpu.memory_space<vmem>>, %arg5: memref<1x64xf32, #tpu.memory_space<vmem>>, %arg6: memref<768x32xf32, #tpu.memory_space<vmem>>, %arg7: memref<1x32xf32, #tpu.memory_space<vmem>>, %arg8: memref<8x32xf32, #tpu.memory_space<vmem>>, %arg9: memref<136x56xf32, #tpu.memory_space<vmem>>, %arg10: memref<128x64xf32, #tpu.memory_space<vmem>>) attributes {dimension_semantics = [#tpu.dimension_semantics<parallel>], iteration_bounds = array<i64: 1>, scalar_prefetch = 0 : i64, scratch_operands = 2 : i64, tpu.core_type = #tpu.core_type<tc>, window_params = [{transform_indices = @transform_0, window_bounds = array<i64: 128, 448>}, {pipeline_mode = #tpu.pipeline_mode<synchronous>, transform_indices = @transform_1, window_bounds = array<i64: 448, 56>}, {pipeline_mode = #tpu.pipeline_mode<synchronous>, transform_indices = @transform_2, window_bounds = array<i64: 1, 56>}, {pipeline_mode = #tpu.pipeline_mode<synchronous>, transform_indices = @transform_3, window_bounds = array<i64: 4, 56, 64>}, {pipeline_mode = #tpu.pipeline_mode<synchronous>, transform_indices = @transform_4, window_bounds = array<i64: 1, 64>}, {pipeline_mode = #tpu.pipeline_mode<synchronous>, transform_indices = @transform_5, window_bounds = array<i64: 768, 32>}, {pipeline_mode = #tpu.pipeline_mode<synchronous>, transform_indices = @transform_6, window_bounds = array<i64: 1, 32>}, {transform_indices = @transform_7, window_bounds = array<i64: 8, 32>}]} {
    %c0 = arith.constant 0 : index
    %c0_0 = arith.constant 0 : index
    %0 = vector.load %arg1[%c0, %c0_0] : memref<128x448xf32, #tpu.memory_space<vmem>>, vector<128x448xf32>
    %c0_1 = arith.constant 0 : index
    %c0_2 = arith.constant 0 : index
    %1 = vector.load %arg2[%c0_1, %c0_2] : memref<448x56xf32, #tpu.memory_space<vmem>>, vector<448x56xf32>
    %cst = arith.constant dense<0.000000e+00> : vector<128x56xf32>
    %2 = tpu.matmul %0, %1, %cst {dimension_numbers = #tpu.dot_dimension_numbers<[1], [0], [0], [1], [0, 0, 1, 1], [], []>} : vector<128x448xf32>, vector<448x56xf32>, vector<128x56xf32> -> vector<128x56xf32>
    %c0_3 = arith.constant 0 : index
    %c0_4 = arith.constant 0 : index
    %3 = vector.load %arg3[%c0_3, %c0_4] : memref<1x56xf32, #tpu.memory_space<vmem>>, vector<1x56xf32>
    %4 = vector.broadcast %3 : vector<1x56xf32> to vector<128x56xf32>
    %5 = arith.addf %2, %4 : vector<128x56xf32>
    %cst_5 = arith.constant 0.000000e+00 : f32
    %6 = vector.broadcast %cst_5 : f32 to vector<128x56xf32>
    %7 = arith.maximumf %5, %6 : vector<128x56xf32>
    %c0_6 = arith.constant 0 : index
    %c0_7 = arith.constant 0 : index
    %8 = vector.load %arg9[%c0_6, %c0_7] : memref<136x56xf32, #tpu.memory_space<vmem>>, vector<128x56xf32>
    tpu.vector_store %arg9[%c0_6, %c0_7], %7 {strides = array<i32>} : memref<136x56xf32, #tpu.memory_space<vmem>>, vector<128x56xf32>,
    %cst_8 = arith.constant 0.000000e+00 : f32
    %9 = vector.broadcast %cst_8 : f32 to vector<8x56xf32>
    %c128 = arith.constant 128 : index
    %c0_9 = arith.constant 0 : index
    %10 = vector.load %arg9[%c128, %c0_9] : memref<136x56xf32, #tpu.memory_space<vmem>>, vector<8x56xf32>
    tpu.vector_store %arg9[%c128, %c0_9], %9 {strides = array<i32>} : memref<136x56xf32, #tpu.memory_space<vmem>>, vector<8x56xf32>,
    %c0_10 = arith.constant 0 : index
    %c0_11 = arith.constant 0 : index
    %11 = vector.load %arg9[%c0_10, %c0_11] : memref<136x56xf32, #tpu.memory_space<vmem>>, vector<128x56xf32>
    %c0_12 = arith.constant 0 : index
    %c0_13 = arith.constant 0 : index
    %c0_14 = arith.constant 0 : index
    %12 = vector.load %arg4[%c0_12, %c0_13, %c0_14] : memref<4x56x64xf32, #tpu.memory_space<vmem>>, vector<1x56x64xf32>
    %13 = vector.shape_cast %12 : vector<1x56x64xf32> to vector<56x64xf32>
    %cst_15 = arith.constant dense<0.000000e+00> : vector<128x64xf32>
    %14 = tpu.matmul %11, %13, %cst_15 {dimension_numbers = #tpu.dot_dimension_numbers<[1], [0], [0], [1], [0, 0, 1, 1], [], []>} : vector<128x56xf32>, vector<56x64xf32>, vector<128x64xf32> -> vector<128x64xf32>
    %c1 = arith.constant 1 : index
    %c0_16 = arith.constant 0 : index
    %15 = vector.load %arg9[%c1, %c0_16] : memref<136x56xf32, #tpu.memory_space<vmem>>, vector<128x56xf32>
    %c1_17 = arith.constant 1 : index
    %c0_18 = arith.constant 0 : index
    %c0_19 = arith.constant 0 : index
    %16 = vector.load %arg4[%c1_17, %c0_18, %c0_19] : memref<4x56x64xf32, #tpu.memory_space<vmem>>, vector<1x56x64xf32>
    %17 = vector.shape_cast %16 : vector<1x56x64xf32> to vector<56x64xf32>
    %cst_20 = arith.constant dense<0.000000e+00> : vector<128x64xf32>
    %18 = tpu.matmul %15, %17, %cst_20 {dimension_numbers = #tpu.dot_dimension_numbers<[1], [0], [0], [1], [0, 0, 1, 1], [], []>} : vector<128x56xf32>, vector<56x64xf32>, vector<128x64xf32> -> vector<128x64xf32>
    %c2 = arith.constant 2 : index
    %c0_21 = arith.constant 0 : index
    %19 = vector.load %arg9[%c2, %c0_21] : memref<136x56xf32, #tpu.memory_space<vmem>>, vector<128x56xf32>
    %c2_22 = arith.constant 2 : index
    %c0_23 = arith.constant 0 : index
    %c0_24 = arith.constant 0 : index
    %20 = vector.load %arg4[%c2_22, %c0_23, %c0_24] : memref<4x56x64xf32, #tpu.memory_space<vmem>>, vector<1x56x64xf32>
    %21 = vector.shape_cast %20 : vector<1x56x64xf32> to vector<56x64xf32>
    %cst_25 = arith.constant dense<0.000000e+00> : vector<128x64xf32>
    %22 = tpu.matmul %19, %21, %cst_25 {dimension_numbers = #tpu.dot_dimension_numbers<[1], [0], [0], [1], [0, 0, 1, 1], [], []>} : vector<128x56xf32>, vector<56x64xf32>, vector<128x64xf32> -> vector<128x64xf32>
    %c3 = arith.constant 3 : index
    %c0_26 = arith.constant 0 : index
    %23 = vector.load %arg9[%c3, %c0_26] : memref<136x56xf32, #tpu.memory_space<vmem>>, vector<128x56xf32>
    %c3_27 = arith.constant 3 : index
    %c0_28 = arith.constant 0 : index
    %c0_29 = arith.constant 0 : index
    %24 = vector.load %arg4[%c3_27, %c0_28, %c0_29] : memref<4x56x64xf32, #tpu.memory_space<vmem>>, vector<1x56x64xf32>
    %25 = vector.shape_cast %24 : vector<1x56x64xf32> to vector<56x64xf32>
    %cst_30 = arith.constant dense<0.000000e+00> : vector<128x64xf32>
    %26 = tpu.matmul %23, %25, %cst_30 {dimension_numbers = #tpu.dot_dimension_numbers<[1], [0], [0], [1], [0, 0, 1, 1], [], []>} : vector<128x56xf32>, vector<56x64xf32>, vector<128x64xf32> -> vector<128x64xf32>
    %27 = arith.addf %14, %18 : vector<128x64xf32>
    %28 = arith.addf %22, %26 : vector<128x64xf32>
    %29 = arith.addf %27, %28 : vector<128x64xf32>
    %c0_31 = arith.constant 0 : index
    %c0_32 = arith.constant 0 : index
    %30 = vector.load %arg5[%c0_31, %c0_32] : memref<1x64xf32, #tpu.memory_space<vmem>>, vector<1x64xf32>
    %31 = vector.broadcast %30 : vector<1x64xf32> to vector<128x64xf32>
    %32 = arith.addf %29, %31 : vector<128x64xf32>
    %cst_33 = arith.constant 0.000000e+00 : f32
    %33 = vector.broadcast %cst_33 : f32 to vector<128x64xf32>
    %34 = arith.maximumf %32, %33 : vector<128x64xf32>
    %c0_34 = arith.constant 0 : index
    %c0_35 = arith.constant 0 : index
    %35 = vector.load %arg10[%c0_34, %c0_35] : memref<128x64xf32, #tpu.memory_space<vmem>>, vector<128x64xf32>
    tpu.vector_store %arg10[%c0_34, %c0_35], %34 {strides = array<i32>} : memref<128x64xf32, #tpu.memory_space<vmem>>, vector<128x64xf32>,
    %c0_36 = arith.constant 0 : index
    %c0_37 = arith.constant 0 : index
    %36 = tpu.strided_load %arg10[%c0_36, %c0_37] {strides = array<i32: 16, 1>} : memref<128x64xf32, #tpu.memory_space<vmem>>, vector<8x64xf32>
    %c1_38 = arith.constant 1 : index
    %c0_39 = arith.constant 0 : index
    %37 = tpu.strided_load %arg10[%c1_38, %c0_39] {strides = array<i32: 16, 1>} : memref<128x64xf32, #tpu.memory_space<vmem>>, vector<8x64xf32>
    %c2_40 = arith.constant 2 : index
    %c0_41 = arith.constant 0 : index
    %38 = tpu.strided_load %arg10[%c2_40, %c0_41] {strides = array<i32: 16, 1>} : memref<128x64xf32, #tpu.memory_space<vmem>>, vector<8x64xf32>
    %c3_42 = arith.constant 3 : index
    %c0_43 = arith.constant 0 : index
    %39 = tpu.strided_load %arg10[%c3_42, %c0_43] {strides = array<i32: 16, 1>} : memref<128x64xf32, #tpu.memory_space<vmem>>, vector<8x64xf32>
    %c4 = arith.constant 4 : index
    %c0_44 = arith.constant 0 : index
    %40 = tpu.strided_load %arg10[%c4, %c0_44] {strides = array<i32: 16, 1>} : memref<128x64xf32, #tpu.memory_space<vmem>>, vector<8x64xf32>
    %c5 = arith.constant 5 : index
    %c0_45 = arith.constant 0 : index
    %41 = tpu.strided_load %arg10[%c5, %c0_45] {strides = array<i32: 16, 1>} : memref<128x64xf32, #tpu.memory_space<vmem>>, vector<8x64xf32>
    %c6 = arith.constant 6 : index
    %c0_46 = arith.constant 0 : index
    %42 = tpu.strided_load %arg10[%c6, %c0_46] {strides = array<i32: 16, 1>} : memref<128x64xf32, #tpu.memory_space<vmem>>, vector<8x64xf32>
    %c7 = arith.constant 7 : index
    %c0_47 = arith.constant 0 : index
    %43 = tpu.strided_load %arg10[%c7, %c0_47] {strides = array<i32: 16, 1>} : memref<128x64xf32, #tpu.memory_space<vmem>>, vector<8x64xf32>
    %c8 = arith.constant 8 : index
    %c0_48 = arith.constant 0 : index
    %44 = tpu.strided_load %arg10[%c8, %c0_48] {strides = array<i32: 16, 1>} : memref<128x64xf32, #tpu.memory_space<vmem>>, vector<8x64xf32>
    %c9 = arith.constant 9 : index
    %c0_49 = arith.constant 0 : index
    %45 = tpu.strided_load %arg10[%c9, %c0_49] {strides = array<i32: 16, 1>} : memref<128x64xf32, #tpu.memory_space<vmem>>, vector<8x64xf32>
    %c10 = arith.constant 10 : index
    %c0_50 = arith.constant 0 : index
    %46 = tpu.strided_load %arg10[%c10, %c0_50] {strides = array<i32: 16, 1>} : memref<128x64xf32, #tpu.memory_space<vmem>>, vector<8x64xf32>
    %c11 = arith.constant 11 : index
    %c0_51 = arith.constant 0 : index
    %47 = tpu.strided_load %arg10[%c11, %c0_51] {strides = array<i32: 16, 1>} : memref<128x64xf32, #tpu.memory_space<vmem>>, vector<8x64xf32>
    %48 = tpu.concatenate %36, %37, %38, %39, %40, %41, %42, %43, %44, %45, %46, %47 in 1 : vector<8x64xf32>, vector<8x64xf32>, vector<8x64xf32>, vector<8x64xf32>, vector<8x64xf32>, vector<8x64xf32>, vector<8x64xf32>, vector<8x64xf32>, vector<8x64xf32>, vector<8x64xf32>, vector<8x64xf32>, vector<8x64xf32> -> vector<8x768xf32>
    %c0_52 = arith.constant 0 : index
    %c0_53 = arith.constant 0 : index
    %49 = vector.load %arg6[%c0_52, %c0_53] : memref<768x32xf32, #tpu.memory_space<vmem>>, vector<768x32xf32>
    %cst_54 = arith.constant dense<0.000000e+00> : vector<8x32xf32>
    %50 = tpu.matmul %48, %49, %cst_54 {dimension_numbers = #tpu.dot_dimension_numbers<[1], [0], [0], [1], [0, 0, 1, 1], [], []>} : vector<8x768xf32>, vector<768x32xf32>, vector<8x32xf32> -> vector<8x32xf32>
    %c0_55 = arith.constant 0 : index
    %c0_56 = arith.constant 0 : index
    %51 = vector.load %arg7[%c0_55, %c0_56] : memref<1x32xf32, #tpu.memory_space<vmem>>, vector<1x32xf32>
    %52 = vector.broadcast %51 : vector<1x32xf32> to vector<8x32xf32>
    %53 = arith.addf %50, %52 : vector<8x32xf32>
    %cst_57 = arith.constant 0.000000e+00 : f32
    %54 = vector.broadcast %cst_57 : f32 to vector<8x32xf32>
    %55 = arith.subf %54, %53 : vector<8x32xf32>
    %56 = math.exp %55 : vector<8x32xf32>
    %cst_58 = arith.constant 1.000000e+00 : f32
    %57 = vector.broadcast %cst_58 : f32 to vector<8x32xf32>
    %58 = arith.addf %57, %56 : vector<8x32xf32>
    %59 = tpu.reciprocal %58 {approx = true} : vector<8x32xf32> -> vector<8x32xf32>
    %c0_59 = arith.constant 0 : index
    %c0_60 = arith.constant 0 : index
    %60 = vector.load %arg8[%c0_59, %c0_60] : memref<8x32xf32, #tpu.memory_space<vmem>>, vector<8x32xf32>
    tpu.vector_store %arg8[%c0_59, %c0_60], %59 {strides = array<i32>} : memref<8x32xf32, #tpu.memory_space<vmem>>, vector<8x32xf32>,
    return
  }
  func.func @transform_0(%arg0: i32) -> (i32, i32) {
    %c0_i32 = arith.constant 0 : i32
    %c0_i32_0 = arith.constant 0 : i32
    return %arg0, %c0_i32 : i32, i32
  }
  func.func @transform_1(%arg0: i32) -> (i32, i32) {
    %c0_i32 = arith.constant 0 : i32
    %c0_i32_0 = arith.constant 0 : i32
    %c0_i32_1 = arith.constant 0 : i32
    return %c0_i32, %c0_i32_0 : i32, i32
  }
  func.func @transform_2(%arg0: i32) -> (i32, i32) {
    %c0_i32 = arith.constant 0 : i32
    %c0_i32_0 = arith.constant 0 : i32
    %c0_i32_1 = arith.constant 0 : i32
    return %c0_i32, %c0_i32_0 : i32, i32
  }
  func.func @transform_3(%arg0: i32) -> (i32, i32, i32) {
    %c0_i32 = arith.constant 0 : i32
    %c0_i32_0 = arith.constant 0 : i32
    %c0_i32_1 = arith.constant 0 : i32
    %c0_i32_2 = arith.constant 0 : i32
    return %c0_i32, %c0_i32_0, %c0_i32_1 : i32, i32, i32
  }
  func.func @transform_4(%arg0: i32) -> (i32, i32) {
    %c0_i32 = arith.constant 0 : i32
    %c0_i32_0 = arith.constant 0 : i32
    %c0_i32_1 = arith.constant 0 : i32
    return %c0_i32, %c0_i32_0 : i32, i32
  }
  func.func @transform_5(%arg0: i32) -> (i32, i32) {
    %c0_i32 = arith.constant 0 : i32
    %c0_i32_0 = arith.constant 0 : i32
    %c0_i32_1 = arith.constant 0 : i32
    return %c0_i32, %c0_i32_0 : i32, i32
  }
  func.func @transform_6(%arg0: i32) -> (i32, i32) {
    %c0_i32 = arith.constant 0 : i32
    %c0_i32_0 = arith.constant 0 : i32
    %c0_i32_1 = arith.constant 0 : i32
    return %c0_i32, %c0_i32_0 : i32, i32
  }
  func.func @transform_7(%arg0: i32) -> (i32, i32) {
    %c0_i32 = arith.constant 0 : i32
    %c0_i32_0 = arith.constant 0 : i32
    return %arg0, %c0_i32 : i32, i32
  }
}

</mosaic_0001>

<llo_original>
// kernel: tile.13
$region0: #{tile.13}
  #allocation0 [shape = 's32[1]{0}', space=sflag, size = 0x4, scoped, tag = 'scoped memory for tile.13']
  %s0 = inlined_call_operand.vmem [shape: f32[8], index: 0, kind: input, shape index: {}]
  %s1 = inlined_call_operand.vmem [shape: f32[7,8], index: 1, kind: output, shape index: {}]
  // Predicated region
  $region2: #{tile.13} parent=0 // pred_check
    _
  $region3: #{tile.13} parent=0 // pred_check_branch
    %3 = sbr.rel (0) target = $region5
  $region4: #{tile.13} parent=0 // pred_region
    _
  $region5: #{tile.13} parent=0 // pred_fallthru
    _
  %v4 = vld [vmem:[%s0] ss:$0 sm:$0xff]
  %5 = vst [vmem:[%s1] sm:$0xff] %v4

// kernel: tile.14
$region0: #{tile.14}
  %s0 = inlined_call_operand.vmem [shape: f32[7,8], index: 0, kind: input, shape index: {}]
  %s1 = inlined_call_operand.vmem [shape: f32[1,56], index: 1, kind: output, shape index: {}]
  $region1: #{tile.14} parent=0
    #allocation0 [shape = 'u8[4096]{0}', space=vmem, size = 0x1000, scoped, tag = 'scoped mem for output reshape']
    %v2 = vld [vmem:[%s0] sm:$0x1]
    %vm3 = vcmask 64512
    %4 = vst.msk [vmem:[#allocation0] sm:$0x1] %vm3, %v2
    %s5 = scalar_lea.vmem %s0, 6
    %v6 = vld [vmem:[%s5] sm:$0x1]
    %7 = vrot.lane.b32.xlu0 %v6, 48
    %v8 = vpop.permute.xlu0 %7
    %vm9 = vcmask 458112
    %10 = vst.msk [vmem:[#allocation0] sm:$0x1] %vm9, %v8
    %s11 = scalar_lea.vmem %s0, 5
    %v12 = vld [vmem:[%s11] sm:$0x1]
    %13 = vrot.lane.b32.xlu0 %v12, 40
    %v14 = vpop.permute.xlu0 %13
    %vm15 = vcmask 392512
    %16 = vst.msk [vmem:[#allocation0] sm:$0x1] %vm15, %v14
    %s17 = scalar_lea.vmem %s0, 4
    %v18 = vld [vmem:[%s17] sm:$0x1]
    %19 = vrot.lane.b32.xlu0 %v18, 32
    %v20 = vpop.permute.xlu0 %19
    %vm21 = vcmask 326912
    %22 = vst.msk [vmem:[#allocation0] sm:$0x1] %vm21, %v20
    %s23 = scalar_lea.vmem %s0, 3
    %v24 = vld [vmem:[%s23] sm:$0x1]
    %25 = vrot.lane.b32.xlu0 %v24, 24
    %v26 = vpop.permute.xlu0 %25
    %vm27 = vcmask 261312
    %28 = vst.msk [vmem:[#allocation0] sm:$0x1] %vm27, %v26
    %s29 = scalar_lea.vmem %s0, 2
    %v30 = vld [vmem:[%s29] sm:$0x1]
    %31 = vrot.lane.b32.xlu0 %v30, 16
    %v32 = vpop.permute.xlu0 %31
    %vm33 = vcmask 195712
    %34 = vst.msk [vmem:[#allocation0] sm:$0x1] %vm33, %v32
    %s35 = scalar_lea.vmem %s0, 1
    %v36 = vld [vmem:[%s35] sm:$0x1]
    %37 = vrot.lane.b32.xlu0 %v36, 8
    %v38 = vpop.permute.xlu0 %37
    %vm39 = vcmask 130112
    %40 = vst.msk [vmem:[#allocation0] sm:$0x1] %vm39, %v38
    %s42 = sshll.u32 1, 1
    %s43 = ssub.s32 %s42, 1
    %v45 = vld [vmem:[#allocation0] sm:%s43]
    %s46 = sshll.u32 1, 1
    %s47 = ssub.s32 %s46, 1
    %48 = vst [vmem:[%s1] sm:%s47] %v45

// kernel: tile.18
$region0: #{tile.18}
  #allocation0 [shape = 's32[1]{0}', space=sflag, size = 0x4, scoped, tag = 'scoped memory for tile.18']
  %s0 = inlined_call_operand.vmem [shape: f32[16], index: 0, kind: input, shape index: {}]
  %s1 = inlined_call_operand.vmem [shape: f32[4,16], index: 1, kind: output, shape index: {}]
  // Predicated region
  $region2: #{tile.18} parent=0 // pred_check
    _
  $region3: #{tile.18} parent=0 // pred_check_branch
    %3 = sbr.rel (0) target = $region5
  $region4: #{tile.18} parent=0 // pred_region
    _
  $region5: #{tile.18} parent=0 // pred_fallthru
    _
  %v4 = vld [vmem:[%s0] ss:$0 sm:$0xff]
  %5 = vst [vmem:[%s1] sm:$0xf] %v4

// kernel: tile.19
$region0: #{tile.19}
  %s0 = inlined_call_operand.vmem [shape: f32[4,16], index: 0, kind: input, shape index: {}]
  %s1 = inlined_call_operand.vmem [shape: f32[1,64], index: 1, kind: output, shape index: {}]
  $region1: #{tile.19} parent=0
    #allocation0 [shape = 'u8[4096]{0}', space=vmem, size = 0x1000, scoped, tag = 'scoped mem for output reshape']
    #allocation1 [shape = 'u8[4096]{0}', space=vmem, size = 0x1000, scoped, tag = 'scoped mem for input reshape']
    %s3 = sshll.u32 1, 4
    %s4 = ssub.s32 %s3, 1
    %v5 = vld [vmem:[%s0] sm:%s4]
    %6 = vst [vmem:[#allocation1] sm:%s4] %v5
    %v7 = vld [vmem:[#allocation1] sm:$0x1]
    %vm8 = vcmask 130048
    %9 = vst.msk [vmem:[#allocation0] sm:$0x1] %vm8, %v7
    %s10 = scalar_lea.vmem [#allocation1], 3
    %v11 = vld [vmem:[%s10] sm:$0x1]
    %12 = vrot.lane.b32.xlu0 %v11, 48
    %v13 = vpop.permute.xlu0 %12
    %vm14 = vcmask 523648
    %15 = vst.msk [vmem:[#allocation0] sm:$0x1] %vm14, %v13
    %s16 = scalar_lea.vmem [#allocation1], 2
    %v17 = vld [vmem:[%s16] sm:$0x1]
    %18 = vrot.lane.b32.xlu0 %v17, 32
    %v19 = vpop.permute.xlu0 %18
    %vm20 = vcmask 392448
    %21 = vst.msk [vmem:[#allocation0] sm:$0x1] %vm20, %v19
    %s22 = scalar_lea.vmem [#allocation1], 1
    %v23 = vld [vmem:[%s22] sm:$0x1]
    %24 = vrot.lane.b32.xlu0 %v23, 16
    %v25 = vpop.permute.xlu0 %24
    %vm26 = vcmask 261248
    %27 = vst.msk [vmem:[#allocation0] sm:$0x1] %vm26, %v25
    %s29 = sshll.u32 1, 1
    %s30 = ssub.s32 %s29, 1
    %v32 = vld [vmem:[#allocation0] sm:%s30]
    %s33 = sshll.u32 1, 1
    %s34 = ssub.s32 %s33, 1
    %35 = vst [vmem:[%s1] sm:%s34] %v32

// kernel: encoder_forward.1
$region0: #{encoder_forward.1}
  #allocation0 [shape = 'u32[]', space=smem, size = 0x4, offset = 0x4, fixed_abs, tag = 'smem constant byte address 0x4 - core index']
  #allocation1 [shape = 'u32[144,128]{1,0:T(1,128)}', space=vmem, size = 0x12000, scoped, tag = 'internal scratch']
  #allocation2 [shape = 'f32[136,56]{1,0:T(8,128)}', space=vmem, size = 0x11000, scoped, tag = 'scratch operand']
  #allocation3 [shape = 'f32[128,64]{1,0:T(8,128)}', space=vmem, size = 0x10000, scoped, tag = 'scratch operand']
  %s0 = inlined_call_operand.vmem [shape: f32[128,448], index: 0, kind: input, shape index: {}]
  %s1 = inlined_call_operand.vmem [shape: f32[448,56], index: 1, kind: input, shape index: {}]
  %s2 = inlined_call_operand.vmem [shape: f32[1,56], index: 2, kind: input, shape index: {}]
  %s3 = inlined_call_operand.vmem [shape: f32[4,56,64], index: 3, kind: input, shape index: {}]
  %s4 = inlined_call_operand.vmem [shape: f32[1,64], index: 4, kind: input, shape index: {}]
  %s5 = inlined_call_operand.vmem [shape: f32[768,32], index: 5, kind: input, shape index: {}]
  %s6 = inlined_call_operand.vmem [shape: f32[1,32], index: 6, kind: input, shape index: {}]
  %s7 = inlined_call_operand.vmem [shape: f32[8,32], index: 7, kind: output, shape index: {}]
  %s8 = sld [smem:[#allocation0]]
  $region38: #{encoder_forward.1} parent=0
    _
  %s10 = ssub.s32 1, %s8
  %s11 = scalar_select 0, %s10, %s8
  // Predicated region
  $region2: #{encoder_forward.1} parent=0 // pred_check
    _
  $region3: #{encoder_forward.1} parent=0 // pred_check_branch
    %13 = sbr.rel (0) target = $region5
  $region4: #{encoder_forward.1} parent=0 // pred_region
    _
  $region5: #{encoder_forward.1} parent=0 // pred_fallthru
    _
  // Predicated region
  $region6: #{encoder_forward.1} parent=0 // pred_check
    _
  $region7: #{encoder_forward.1} parent=0 // pred_check_branch
    %15 = sbr.rel (0) target = $region9
  $region8: #{encoder_forward.1} parent=0 // pred_region
    _
  $region9: #{encoder_forward.1} parent=0 // pred_fallthru
    _
  // Predicated region
  $region10: #{encoder_forward.1} parent=0 // pred_check
    _
  $region11: #{encoder_forward.1} parent=0 // pred_check_branch
    %17 = sbr.rel (0) target = $region13
  $region12: #{encoder_forward.1} parent=0 // pred_region
    _
  $region13: #{encoder_forward.1} parent=0 // pred_fallthru
    _
  // Predicated region
  $region14: #{encoder_forward.1} parent=0 // pred_check
    _
  $region15: #{encoder_forward.1} parent=0 // pred_check_branch
    %19 = sbr.rel (0) target = $region17
  $region16: #{encoder_forward.1} parent=0 // pred_region
    _
  $region17: #{encoder_forward.1} parent=0 // pred_fallthru
    _
  // Predicated region
  $region18: #{encoder_forward.1} parent=0 // pred_check
    _
  $region19: #{encoder_forward.1} parent=0 // pred_check_branch
    %21 = sbr.rel (0) target = $region21
  $region20: #{encoder_forward.1} parent=0 // pred_region
    _
  $region21: #{encoder_forward.1} parent=0 // pred_fallthru
    _
  // Predicated region
  $region22: #{encoder_forward.1} parent=0 // pred_check
    _
  $region23: #{encoder_forward.1} parent=0 // pred_check_branch
    %23 = sbr.rel (0) target = $region25
  $region24: #{encoder_forward.1} parent=0 // pred_region
    _
  $region25: #{encoder_forward.1} parent=0 // pred_fallthru
    _
  // Predicated region
  $region26: #{encoder_forward.1} parent=0 // pred_check
    _
  $region27: #{encoder_forward.1} parent=0 // pred_check_branch
    %25 = sbr.rel (0) target = $region29
  $region28: #{encoder_forward.1} parent=0 // pred_region
    _
  $region29: #{encoder_forward.1} parent=0 // pred_fallthru
    _
  %v26 = vld [vmem:[%s0] sm:$0xff]
  %v27 = vld [vmem:[%s0 + $0x8] sm:$0xff]
  %v28 = vld [vmem:[%s0 + $0x10] sm:$0xff]
  %v29 = vld [vmem:[%s0 + $0x18] sm:$0xff]
  %v30 = vld [vmem:[%s0 + $0x20] sm:$0xff]
  %v31 = vld [vmem:[%s0 + $0x28] sm:$0xff]
  %v32 = vld [vmem:[%s0 + $0x30] sm:$0xff]
  %v33 = vld [vmem:[%s0 + $0x38] sm:$0xff]
  %v34 = vld [vmem:[%s0 + $0x40] sm:$0xff]
  %v35 = vld [vmem:[%s0 + $0x48] sm:$0xff]
  %v36 = vld [vmem:[%s0 + $0x50] sm:$0xff]
  %v37 = vld [vmem:[%s0 + $0x58] sm:$0xff]
  %v38 = vld [vmem:[%s0 + $0x60] sm:$0xff]
  %v39 = vld [vmem:[%s0 + $0x68] sm:$0xff]
  %v40 = vld [vmem:[%s0 + $0x70] sm:$0xff]
  %v41 = vld [vmem:[%s0 + $0x78] sm:$0xff]
  %v42 = vld [vmem:[%s0 + $0x80] sm:$0xff]
  %v43 = vld [vmem:[%s0 + $0x88] sm:$0xff]
  %v44 = vld [vmem:[%s0 + $0x90] sm:$0xff]
  %v45 = vld [vmem:[%s0 + $0x98] sm:$0xff]
  %v46 = vld [vmem:[%s0 + $0xa0] sm:$0xff]
  %v47 = vld [vmem:[%s0 + $0xa8] sm:$0xff]
  %v48 = vld [vmem:[%s0 + $0xb0] sm:$0xff]
  %v49 = vld [vmem:[%s0 + $0xb8] sm:$0xff]
  %v50 = vld [vmem:[%s0 + $0xc0] sm:$0xff]
  %v51 = vld [vmem:[%s0 + $0xc8] sm:$0xff]
  %v52 = vld [vmem:[%s0 + $0xd0] sm:$0xff]
  %v53 = vld [vmem:[%s0 + $0xd8] sm:$0xff]
  %v54 = vld [vmem:[%s0 + $0xe0] sm:$0xff]
  %v55 = vld [vmem:[%s0 + $0xe8] sm:$0xff]
  %v56 = vld [vmem:[%s0 + $0xf0] sm:$0xff]
  %v57 = vld [vmem:[%s0 + $0xf8] sm:$0xff]
  %v58 = vld [vmem:[%s0 + $0x100] sm:$0xff]
  %v59 = vld [vmem:[%s0 + $0x108] sm:$0xff]
  %v60 = vld [vmem:[%s0 + $0x110] sm:$0xff]
  %v61 = vld [vmem:[%s0 + $0x118] sm:$0xff]
  %v62 = vld [vmem:[%s0 + $0x120] sm:$0xff]
  %v63 = vld [vmem:[%s0 + $0x128] sm:$0xff]
  %v64 = vld [vmem:[%s0 + $0x130] sm:$0xff]
  %v65 = vld [vmem:[%s0 + $0x138] sm:$0xff]
  %v66 = vld [vmem:[%s0 + $0x140] sm:$0xff]
  %v67 = vld [vmem:[%s0 + $0x148] sm:$0xff]
  %v68 = vld [vmem:[%s0 + $0x150] sm:$0xff]
  %v69 = vld [vmem:[%s0 + $0x158] sm:$0xff]
  %v70 = vld [vmem:[%s0 + $0x160] sm:$0xff]
  %v71 = vld [vmem:[%s0 + $0x168] sm:$0xff]
  %v72 = vld [vmem:[%s0 + $0x170] sm:$0xff]
  %v73 = vld [vmem:[%s0 + $0x178] sm:$0xff]
  %v74 = vld [vmem:[%s0 + $0x180] sm:$0xff]
  %v75 = vld [vmem:[%s0 + $0x188] sm:$0xff]
  %v76 = vld [vmem:[%s0 + $0x190] sm:$0xff]
  %v77 = vld [vmem:[%s0 + $0x198] sm:$0xff]
  %v78 = vld [vmem:[%s0 + $0x1a0] sm:$0xff]
  %v79 = vld [vmem:[%s0 + $0x1a8] sm:$0xff]
  %v80 = vld [vmem:[%s0 + $0x1b0] sm:$0xff]
  %v81 = vld [vmem:[%s0 + $0x1b8] sm:$0xff]
  %v82 = vld [vmem:[%s0 + $0x1c0] sm:$0xff]
  %v83 = vld [vmem:[%s0 + $0x1c8] sm:$0xff]
  %v84 = vld [vmem:[%s0 + $0x1d0] sm:$0xff]
  %v85 = vld [vmem:[%s0 + $0x1d8] sm:$0xff]
  %v86 = vld [vmem:[%s0 + $0x1e0] sm:$0xff]
  %v87 = vld [vmem:[%s0 + $0x1e8] sm:$0xff]
  %v88 = vld [vmem:[%s0 + $0x1f0] sm:$0xff]
  %v89 = vld [vmem:[%s0 + $0x1f8] sm:$0xff]
  %v90 = vld [vmem:[%s1] sm:$0xff]
  %v91 = vld [vmem:[%s1 + $0x8] sm:$0xff]
  %v92 = vld [vmem:[%s1 + $0x10] sm:$0xff]
  %v93 = vld [vmem:[%s1 + $0x18] sm:$0xff]
  %v94 = vld [vmem:[%s1 + $0x20] sm:$0xff]
  %v95 = vld [vmem:[%s1 + $0x28] sm:$0xff]
  %v96 = vld [vmem:[%s1 + $0x30] sm:$0xff]
  %v97 = vld [vmem:[%s1 + $0x38] sm:$0xff]
  %v98 = vld [vmem:[%s1 + $0x40] sm:$0xff]
  %v99 = vld [vmem:[%s1 + $0x48] sm:$0xff]
  %v100 = vld [vmem:[%s1 + $0x50] sm:$0xff]
  %v101 = vld [vmem:[%s1 + $0x58] sm:$0xff]
  %v102 = vld [vmem:[%s1 + $0x60] sm:$0xff]
  %v103 = vld [vmem:[%s1 + $0x68] sm:$0xff]
  %v104 = vld [vmem:[%s1 + $0x70] sm:$0xff]
  %v105 = vld [vmem:[%s1 + $0x78] sm:$0xff]
  %v106 = vld [vmem:[%s1 + $0x80] sm:$0xff]
  %v107 = vld [vmem:[%s1 + $0x88] sm:$0xff]
  %v108 = vld [vmem:[%s1 + $0x90] sm:$0xff]
  %v109 = vld [vmem:[%s1 + $0x98] sm:$0xff]
  %v110 = vld [vmem:[%s1 + $0xa0] sm:$0xff]
  %v111 = vld [vmem:[%s1 + $0xa8] sm:$0xff]
  %v112 = vld [vmem:[%s1 + $0xb0] sm:$0xff]
  %v113 = vld [vmem:[%s1 + $0xb8] sm:$0xff]
  %v114 = vld [vmem:[%s1 + $0xc0] sm:$0xff]
  %v115 = vld [vmem:[%s1 + $0xc8] sm:$0xff]
  %v116 = vld [vmem:[%s1 + $0xd0] sm:$0xff]
  %v117 = vld [vmem:[%s1 + $0xd8] sm:$0xff]
  %v118 = vld [vmem:[%s1 + $0xe0] sm:$0xff]
  %v119 = vld [vmem:[%s1 + $0xe8] sm:$0xff]
  %v120 = vld [vmem:[%s1 + $0xf0] sm:$0xff]
  %v121 = vld [vmem:[%s1 + $0xf8] sm:$0xff]
  %v122 = vld [vmem:[%s1 + $0x100] sm:$0xff]
  %v123 = vld [vmem:[%s1 + $0x108] sm:$0xff]
  %v124 = vld [vmem:[%s1 + $0x110] sm:$0xff]
  %v125 = vld [vmem:[%s1 + $0x118] sm:$0xff]
  %v126 = vld [vmem:[%s1 + $0x120] sm:$0xff]
  %v127 = vld [vmem:[%s1 + $0x128] sm:$0xff]
  %v128 = vld [vmem:[%s1 + $0x130] sm:$0xff]
  %v129 = vld [vmem:[%s1 + $0x138] sm:$0xff]
  %v130 = vld [vmem:[%s1 + $0x140] sm:$0xff]
  %v131 = vld [vmem:[%s1 + $0x148] sm:$0xff]
  %v132 = vld [vmem:[%s1 + $0x150] sm:$0xff]
  %v133 = vld [vmem:[%s1 + $0x158] sm:$0xff]
  %v134 = vld [vmem:[%s1 + $0x160] sm:$0xff]
  %v135 = vld [vmem:[%s1 + $0x168] sm:$0xff]
  %v136 = vld [vmem:[%s1 + $0x170] sm:$0xff]
  %v137 = vld [vmem:[%s1 + $0x178] sm:$0xff]
  %v138 = vld [vmem:[%s1 + $0x180] sm:$0xff]
  %v139 = vld [vmem:[%s1 + $0x188] sm:$0xff]
  %v140 = vld [vmem:[%s1 + $0x190] sm:$0xff]
  %v141 = vld [vmem:[%s1 + $0x198] sm:$0xff]
  %v142 = vld [vmem:[%s1 + $0x1a0] sm:$0xff]
  %v143 = vld [vmem:[%s1 + $0x1a8] sm:$0xff]
  %v144 = vld [vmem:[%s1 + $0x1b0] sm:$0xff]
  %v145 = vld [vmem:[%s1 + $0x1b8] sm:$0xff]
  %v146 = vld [vmem:[%s2] sm:$0x1]
  %v148 = vlaneseq
  %v149 = vshrl.u32 %v148, 7
  %v150 = vsub.s32 0, %v149
  %v151 = vrot.slane %v146, %v150
  %vm153 = vcmask 523264
  %v155 = vsel %vm153, %v29, 0
  %v158 = vsel %vm153, %v33, 0
  %v161 = vsel %vm153, %v37, 0
  %v164 = vsel %vm153, %v41, 0
  %v167 = vsel %vm153, %v45, 0
  %v170 = vsel %vm153, %v49, 0
  %v173 = vsel %vm153, %v53, 0
  %v176 = vsel %vm153, %v57, 0
  %v179 = vsel %vm153, %v61, 0
  %v182 = vsel %vm153, %v65, 0
  %v185 = vsel %vm153, %v69, 0
  %v188 = vsel %vm153, %v73, 0
  %v191 = vsel %vm153, %v77, 0
  %v194 = vsel %vm153, %v81, 0
  %v197 = vsel %vm153, %v85, 0
  %v200 = vsel %vm153, %v89, 0
  %202 = vmatprep.subr.mxu0 0.0
  %203 = vmatpush1.msra.mxu0 %v105
  %204 = vmatprep.subr.mxu0 0.0
  %205 = vmatpush1.msra.mxu0 %v104
  %206 = vmatprep.subr.mxu0 0.0
  %207 = vmatpush1.msra.mxu0 %v103
  %208 = vmatprep.subr.mxu0 0.0
  %209 = vmatpush1.msra.mxu0 %v102
  %210 = vmatprep.subr.mxu0 0.0
  %211 = vmatpush1.msra.mxu0 %v101
  %212 = vmatprep.subr.mxu0 0.0
  %213 = vmatpush1.msra.mxu0 %v100
  %214 = vmatprep.subr.mxu0 0.0
  %215 = vmatpush1.msra.mxu0 %v99
  %216 = vmatprep.subr.mxu0 0.0
  %217 = vmatpush1.msra.mxu0 %v98
  %218 = vmatprep.subr.mxu0 0.0
  %219 = vmatpush1.msra.mxu0 %v97
  %220 = vmatprep.subr.mxu0 0.0
  %221 = vmatpush1.msra.mxu0 %v96
  %222 = vmatprep.subr.mxu0 0.0
  %223 = vmatpush1.msra.mxu0 %v95
  %224 = vmatprep.subr.mxu0 0.0
  %225 = vmatpush1.msra.mxu0 %v94
  %226 = vmatprep.subr.mxu0 0.0
  %227 = vmatpush1.msra.mxu0 %v93
  %228 = vmatprep.subr.mxu0 0.0
  %229 = vmatpush1.msra.mxu0 %v92
  %230 = vmatprep.subr.mxu0 0.0
  %231 = vmatpush1.msra.mxu0 %v91
  %232 = vmatprep.subr.mxu0 0.0
  %233 = vmatpush1.msra.mxu0 %v90
  %234 = vmatprep.subr.mxu0 0.0
  %235 = vmatpush2.msra.mxu0 %v121
  %236 = vmatprep.subr.mxu0 0.0
  %237 = vmatpush2.msra.mxu0 %v120
  %238 = vmatprep.subr.mxu0 0.0
  %239 = vmatpush2.msra.mxu0 %v119
  %240 = vmatprep.subr.mxu0 0.0
  %241 = vmatpush2.msra.mxu0 %v118
  %242 = vmatprep.subr.mxu0 0.0
  %243 = vmatpush2.msra.mxu0 %v117
  %244 = vmatprep.subr.mxu0 0.0
  %245 = vmatpush2.msra.mxu0 %v116
  %246 = vmatprep.subr.mxu0 0.0
  %247 = vmatpush2.msra.mxu0 %v115
  %248 = vmatprep.subr.mxu0 0.0
  %249 = vmatpush2.msra.mxu0 %v114
  %250 = vmatprep.subr.mxu0 0.0
  %251 = vmatpush2.msra.mxu0 %v113
  %252 = vmatprep.subr.mxu0 0.0
  %253 = vmatpush2.msra.mxu0 %v112
  %254 = vmatprep.subr.mxu0 0.0
  %255 = vmatpush2.msra.mxu0 %v111
  %256 = vmatprep.subr.mxu0 0.0
  %257 = vmatpush2.msra.mxu0 %v110
  %258 = vmatprep.subr.mxu0 0.0
  %259 = vmatpush2.msra.mxu0 %v109
  %260 = vmatprep.subr.mxu0 0.0
  %261 = vmatpush2.msra.mxu0 %v108
  %262 = vmatprep.subr.mxu0 0.0
  %263 = vmatpush2.msra.mxu0 %v107
  %264 = vmatprep.subr.mxu0 0.0
  %265 = vmatpush2.msra.mxu0 %v106
  %266 = vmatprep.mubr.f32.mxu0 %v27
  %267 = vmatmul.mubr.f32.gmra.mxu0 %v26
  %v268 = vpop.f32.mrf.mxu0
  %v269 = vadd.f32 %v151, %v268
  %v270 = vpop.f32.mrf.mxu0
  %271 = vmatprep.mubr.f32.mxu0 %v31
  %272 = vmatmul.mubr.f32.gmra.mxu0 %v30
  %v273 = vpop.f32.mrf.mxu0
  %v274 = vadd.f32 %v151, %v273
  %v275 = vpop.f32.mrf.mxu0
  %276 = vmatprep.mubr.f32.mxu0 %v35
  %277 = vmatmul.mubr.f32.gmra.mxu0 %v34
  %v278 = vpop.f32.mrf.mxu0
  %v279 = vadd.f32 %v151, %v278
  %v280 = vpop.f32.mrf.mxu0
  %281 = vmatprep.mubr.f32.mxu0 %v39
  %282 = vmatmul.mubr.f32.gmra.mxu0 %v38
  %v283 = vpop.f32.mrf.mxu0
  %v284 = vadd.f32 %v151, %v283
  %v285 = vpop.f32.mrf.mxu0
  %286 = vmatprep.mubr.f32.mxu0 %v43
  %287 = vmatmul.mubr.f32.gmra.mxu0 %v42
  %v288 = vpop.f32.mrf.mxu0
  %v289 = vadd.f32 %v151, %v288
  %v290 = vpop.f32.mrf.mxu0
  %291 = vmatprep.mubr.f32.mxu0 %v47
  %292 = vmatmul.mubr.f32.gmra.mxu0 %v46
  %v293 = vpop.f32.mrf.mxu0
  %v294 = vadd.f32 %v151, %v293
  %v295 = vpop.f32.mrf.mxu0
  %296 = vmatprep.mubr.f32.mxu0 %v51
  %297 = vmatmul.mubr.f32.gmra.mxu0 %v50
  %v298 = vpop.f32.mrf.mxu0
  %v299 = vadd.f32 %v151, %v298
  %v300 = vpop.f32.mrf.mxu0
  %301 = vmatprep.mubr.f32.mxu0 %v55
  %302 = vmatmul.mubr.f32.gmra.mxu0 %v54
  %v303 = vpop.f32.mrf.mxu0
  %v304 = vadd.f32 %v151, %v303
  %v305 = vpop.f32.mrf.mxu0
  %306 = vmatprep.mubr.f32.mxu0 %v59
  %307 = vmatmul.mubr.f32.gmra.mxu0 %v58
  %v308 = vpop.f32.mrf.mxu0
  %v309 = vadd.f32 %v151, %v308
  %v310 = vpop.f32.mrf.mxu0
  %311 = vmatprep.mubr.f32.mxu0 %v63
  %312 = vmatmul.mubr.f32.gmra.mxu0 %v62
  %v313 = vpop.f32.mrf.mxu0
  %v314 = vadd.f32 %v151, %v313
  %v315 = vpop.f32.mrf.mxu0
  %316 = vmatprep.mubr.f32.mxu0 %v67
  %317 = vmatmul.mubr.f32.gmra.mxu0 %v66
  %v318 = vpop.f32.mrf.mxu0
  %v319 = vadd.f32 %v151, %v318
  %v320 = vpop.f32.mrf.mxu0
  %321 = vmatprep.mubr.f32.mxu0 %v71
  %322 = vmatmul.mubr.f32.gmra.mxu0 %v70
  %v323 = vpop.f32.mrf.mxu0
  %v324 = vadd.f32 %v151, %v323
  %v325 = vpop.f32.mrf.mxu0
  %326 = vmatprep.mubr.f32.mxu0 %v75
  %327 = vmatmul.mubr.f32.gmra.mxu0 %v74
  %v328 = vpop.f32.mrf.mxu0
  %v329 = vadd.f32 %v151, %v328
  %v330 = vpop.f32.mrf.mxu0
  %331 = vmatprep.mubr.f32.mxu0 %v79
  %332 = vmatmul.mubr.f32.gmra.mxu0 %v78
  %v333 = vpop.f32.mrf.mxu0
  %v334 = vadd.f32 %v151, %v333
  %v335 = vpop.f32.mrf.mxu0
  %336 = vmatprep.mubr.f32.mxu0 %v83
  %337 = vmatmul.mubr.f32.gmra.mxu0 %v82
  %v338 = vpop.f32.mrf.mxu0
  %v339 = vadd.f32 %v151, %v338
  %v340 = vpop.f32.mrf.mxu0
  %341 = vmatprep.mubr.f32.mxu0 %v87
  %342 = vmatmul.mubr.f32.gmra.mxu0 %v86
  %v343 = vpop.f32.mrf.mxu0
  %v344 = vadd.f32 %v151, %v343
  %v345 = vpop.f32.mrf.mxu0
  %346 = vdwg.mxu0
  %347 = vmatprep.subr.mxu0 0.0
  %348 = vmatpush1.msra.mxu0 %v137
  %349 = vmatprep.subr.mxu0 0.0
  %350 = vmatpush1.msra.mxu0 %v136
  %351 = vmatprep.subr.mxu0 0.0
  %352 = vmatpush1.msra.mxu0 %v135
  %353 = vmatprep.subr.mxu0 0.0
  %354 = vmatpush1.msra.mxu0 %v134
  %355 = vmatprep.subr.mxu0 0.0
  %356 = vmatpush1.msra.mxu0 %v133
  %357 = vmatprep.subr.mxu0 0.0
  %358 = vmatpush1.msra.mxu0 %v132
  %359 = vmatprep.subr.mxu0 0.0
  %360 = vmatpush1.msra.mxu0 %v131
  %361 = vmatprep.subr.mxu0 0.0
  %362 = vmatpush1.msra.mxu0 %v130
  %363 = vmatprep.subr.mxu0 0.0
  %364 = vmatpush1.msra.mxu0 %v129
  %365 = vmatprep.subr.mxu0 0.0
  %366 = vmatpush1.msra.mxu0 %v128
  %367 = vmatprep.subr.mxu0 0.0
  %368 = vmatpush1.msra.mxu0 %v127
  %369 = vmatprep.subr.mxu0 0.0
  %370 = vmatpush1.msra.mxu0 %v126
  %371 = vmatprep.subr.mxu0 0.0
  %372 = vmatpush1.msra.mxu0 %v125
  %373 = vmatprep.subr.mxu0 0.0
  %374 = vmatpush1.msra.mxu0 %v124
  %375 = vmatprep.subr.mxu0 0.0
  %376 = vmatpush1.msra.mxu0 %v123
  %377 = vmatprep.subr.mxu0 0.0
  %378 = vmatpush1.msra.mxu0 %v122
  %379 = vmatprep.subr.mxu0 0.0
  %380 = vmatpush2.msra.mxu0 0.0
  %381 = vmatprep.subr.mxu0 0.0
  %382 = vmatpush2.msra.mxu0 0.0
  %383 = vmatprep.subr.mxu0 0.0
  %384 = vmatpush2.msra.mxu0 0.0
  %385 = vmatprep.subr.mxu0 0.0
  %386 = vmatpush2.msra.mxu0 0.0
  %387 = vmatprep.subr.mxu0 0.0
  %388 = vmatpush2.msra.mxu0 0.0
  %389 = vmatprep.subr.mxu0 0.0
  %390 = vmatpush2.msra.mxu0 0.0
  %391 = vmatprep.subr.mxu0 0.0
  %392 = vmatpush2.msra.mxu0 0.0
  %393 = vmatprep.subr.mxu0 0.0
  %394 = vmatpush2.msra.mxu0 0.0
  %395 = vmatprep.subr.mxu0 0.0
  %396 = vmatpush2.msra.mxu0 %v145
  %397 = vmatprep.subr.mxu0 0.0
  %398 = vmatpush2.msra.mxu0 %v144
  %399 = vmatprep.subr.mxu0 0.0
  %400 = vmatpush2.msra.mxu0 %v143
  %401 = vmatprep.subr.mxu0 0.0
  %402 = vmatpush2.msra.mxu0 %v142
  %403 = vmatprep.subr.mxu0 0.0
  %404 = vmatpush2.msra.mxu0 %v141
  %405 = vmatprep.subr.mxu0 0.0
  %406 = vmatpush2.msra.mxu0 %v140
  %407 = vmatprep.subr.mxu0 0.0
  %408 = vmatpush2.msra.mxu0 %v139
  %409 = vmatprep.subr.mxu0 0.0
  %410 = vmatpush2.msra.mxu0 %v138
  %411 = vmatprep.mubr.f32.mxu0 %v155
  %412 = vmatmul.mubr.f32.gmra.mxu0 %v28
  %v413 = vpop.f32.mrf.mxu0
  %v414 = vadd.f32 %v269, %v413
  %v415 = vpop.f32.mrf.mxu0
  %416 = vmatprep.mubr.f32.mxu0 %v158
  %417 = vmatmul.mubr.f32.gmra.mxu0 %v32
  %v418 = vpop.f32.mrf.mxu0
  %v419 = vadd.f32 %v274, %v418
  %v420 = vpop.f32.mrf.mxu0
  %421 = vmatprep.mubr.f32.mxu0 %v161
  %422 = vmatmul.mubr.f32.gmra.mxu0 %v36
  %v423 = vpop.f32.mrf.mxu0
  %v424 = vadd.f32 %v279, %v423
  %v425 = vpop.f32.mrf.mxu0
  %426 = vmatprep.mubr.f32.mxu0 %v164
  %427 = vmatmul.mubr.f32.gmra.mxu0 %v40
  %v428 = vpop.f32.mrf.mxu0
  %v429 = vadd.f32 %v284, %v428
  %v430 = vpop.f32.mrf.mxu0
  %431 = vmatprep.mubr.f32.mxu0 %v167
  %432 = vmatmul.mubr.f32.gmra.mxu0 %v44
  %v433 = vpop.f32.mrf.mxu0
  %v434 = vadd.f32 %v289, %v433
  %v435 = vpop.f32.mrf.mxu0
  %436 = vmatprep.mubr.f32.mxu0 %v170
  %437 = vmatmul.mubr.f32.gmra.mxu0 %v48
  %v438 = vpop.f32.mrf.mxu0
  %v439 = vadd.f32 %v294, %v438
  %v440 = vpop.f32.mrf.mxu0
  %441 = vmatprep.mubr.f32.mxu0 %v173
  %442 = vmatmul.mubr.f32.gmra.mxu0 %v52
  %v443 = vpop.f32.mrf.mxu0
  %v444 = vadd.f32 %v299, %v443
  %v445 = vpop.f32.mrf.mxu0
  %446 = vmatprep.mubr.f32.mxu0 %v176
  %447 = vmatmul.mubr.f32.gmra.mxu0 %v56
  %v448 = vpop.f32.mrf.mxu0
  %v449 = vadd.f32 %v304, %v448
  %v450 = vpop.f32.mrf.mxu0
  %451 = vmatprep.mubr.f32.mxu0 %v179
  %452 = vmatmul.mubr.f32.gmra.mxu0 %v60
  %v453 = vpop.f32.mrf.mxu0
  %v454 = vadd.f32 %v309, %v453
  %v455 = vpop.f32.mrf.mxu0
  %456 = vmatprep.mubr.f32.mxu0 %v182
  %457 = vmatmul.mubr.f32.gmra.mxu0 %v64
  %v458 = vpop.f32.mrf.mxu0
  %v459 = vadd.f32 %v314, %v458
  %v460 = vpop.f32.mrf.mxu0
  %461 = vmatprep.mubr.f32.mxu0 %v185
  %462 = vmatmul.mubr.f32.gmra.mxu0 %v68
  %v463 = vpop.f32.mrf.mxu0
  %v464 = vadd.f32 %v319, %v463
  %v465 = vpop.f32.mrf.mxu0
  %466 = vmatprep.mubr.f32.mxu0 %v188
  %467 = vmatmul.mubr.f32.gmra.mxu0 %v72
  %v468 = vpop.f32.mrf.mxu0
  %v469 = vadd.f32 %v324, %v468
  %v470 = vpop.f32.mrf.mxu0
  %471 = vmatprep.mubr.f32.mxu0 %v191
  %472 = vmatmul.mubr.f32.gmra.mxu0 %v76
  %v473 = vpop.f32.mrf.mxu0
  %v474 = vadd.f32 %v329, %v473
  %v475 = vpop.f32.mrf.mxu0
  %476 = vmatprep.mubr.f32.mxu0 %v194
  %477 = vmatmul.mubr.f32.gmra.mxu0 %v80
  %v478 = vpop.f32.mrf.mxu0
  %v479 = vadd.f32 %v334, %v478
  %v480 = vpop.f32.mrf.mxu0
  %481 = vmatprep.mubr.f32.mxu0 %v197
  %482 = vmatmul.mubr.f32.gmra.mxu0 %v84
  %v483 = vpop.f32.mrf.mxu0
  %v484 = vadd.f32 %v339, %v483
  %v485 = vpop.f32.mrf.mxu0
  %486 = vmatprep.mubr.f32.mxu0 %v200
  %487 = vmatmul.mubr.f32.gmra.mxu0 %v88
  %v488 = vpop.f32.mrf.mxu0
  %v489 = vadd.f32 %v344, %v488
  %v490 = vpop.f32.mrf.mxu0
  %491 = vdwg.mxu0
  %v492 = vmax.f32 %v414, 0.0
  %v493 = vmax.f32 %v419, 0.0
  %v494 = vmax.f32 %v424, 0.0
  %v495 = vmax.f32 %v429, 0.0
  %v496 = vmax.f32 %v434, 0.0
  %v497 = vmax.f32 %v439, 0.0
  %v498 = vmax.f32 %v444, 0.0
  %v499 = vmax.f32 %v449, 0.0
  %v500 = vmax.f32 %v454, 0.0
  %v501 = vmax.f32 %v459, 0.0
  %v502 = vmax.f32 %v464, 0.0
  %v503 = vmax.f32 %v469, 0.0
  %v504 = vmax.f32 %v474, 0.0
  %v505 = vmax.f32 %v479, 0.0
  %v506 = vmax.f32 %v484, 0.0
  %v507 = vmax.f32 %v489, 0.0
  %vm508 = vcmask 457728
  %509 = vst.msk [vmem:[#allocation2] sm:$0xff] %vm508, %v492
  %510 = vst.msk [vmem:[#allocation2 + $0x8] sm:$0xff] %vm508, %v493
  %511 = vst.msk [vmem:[#allocation2 + $0x10] sm:$0xff] %vm508, %v494
  %512 = vst.msk [vmem:[#allocation2 + $0x18] sm:$0xff] %vm508, %v495
  %513 = vst.msk [vmem:[#allocation2 + $0x20] sm:$0xff] %vm508, %v496
  %514 = vst.msk [vmem:[#allocation2 + $0x28] sm:$0xff] %vm508, %v497
  %515 = vst.msk [vmem:[#allocation2 + $0x30] sm:$0xff] %vm508, %v498
  %516 = vst.msk [vmem:[#allocation2 + $0x38] sm:$0xff] %vm508, %v499
  %517 = vst.msk [vmem:[#allocation2 + $0x40] sm:$0xff] %vm508, %v500
  %518 = vst.msk [vmem:[#allocation2 + $0x48] sm:$0xff] %vm508, %v501
  %519 = vst.msk [vmem:[#allocation2 + $0x50] sm:$0xff] %vm508, %v502
  %520 = vst.msk [vmem:[#allocation2 + $0x58] sm:$0xff] %vm508, %v503
  %521 = vst.msk [vmem:[#allocation2 + $0x60] sm:$0xff] %vm508, %v504
  %522 = vst.msk [vmem:[#allocation2 + $0x68] sm:$0xff] %vm508, %v505
  %523 = vst.msk [vmem:[#allocation2 + $0x70] sm:$0xff] %vm508, %v506
  %524 = vst.msk [vmem:[#allocation2 + $0x78] sm:$0xff] %vm508, %v507
  %525 = vst.msk [vmem:[#allocation2 + $0x80] sm:$0xff] %vm508, 0.0
  %v526 = vld [vmem:[#allocation2] sm:$0xff]
  %v527 = vld [vmem:[#allocation2 + $0x8] sm:$0xff]
  %v528 = vld [vmem:[#allocation2 + $0x10] sm:$0xff]
  %v529 = vld [vmem:[#allocation2 + $0x18] sm:$0xff]
  %v530 = vld [vmem:[#allocation2 + $0x20] sm:$0xff]
  %v531 = vld [vmem:[#allocation2 + $0x28] sm:$0xff]
  %v532 = vld [vmem:[#allocation2 + $0x30] sm:$0xff]
  %v533 = vld [vmem:[#allocation2 + $0x38] sm:$0xff]
  %v534 = vld [vmem:[#allocation2 + $0x40] sm:$0xff]
  %v535 = vld [vmem:[#allocation2 + $0x48] sm:$0xff]
  %v536 = vld [vmem:[#allocation2 + $0x50] sm:$0xff]
  %v537 = vld [vmem:[#allocation2 + $0x58] sm:$0xff]
  %v538 = vld [vmem:[#allocation2 + $0x60] sm:$0xff]
  %v539 = vld [vmem:[#allocation2 + $0x68] sm:$0xff]
  %v540 = vld [vmem:[#allocation2 + $0x70] sm:$0xff]
  %v541 = vld [vmem:[#allocation2 + $0x78] sm:$0xff]
  %v542 = vld [vmem:[%s3] sm:$0xff]
  %v543 = vld [vmem:[%s3 + $0x8] sm:$0xff]
  %v544 = vld [vmem:[%s3 + $0x10] sm:$0xff]
  %v545 = vld [vmem:[%s3 + $0x18] sm:$0xff]
  %v546 = vld [vmem:[%s3 + $0x20] sm:$0xff]
  %v547 = vld [vmem:[%s3 + $0x28] sm:$0xff]
  %v548 = vld [vmem:[%s3 + $0x30] sm:$0xff]
  %v549 = vld [vmem:[#allocation2 + $0x1] sm:$0xff]
  %v550 = vld [vmem:[#allocation2 + $0x9] sm:$0xff]
  %v551 = vld [vmem:[#allocation2 + $0x11] sm:$0xff]
  %v552 = vld [vmem:[#allocation2 + $0x19] sm:$0xff]
  %v553 = vld [vmem:[#allocation2 + $0x21] sm:$0xff]
  %v554 = vld [vmem:[#allocation2 + $0x29] sm:$0xff]
  %v555 = vld [vmem:[#allocation2 + $0x31] sm:$0xff]
  %v556 = vld [vmem:[#allocation2 + $0x39] sm:$0xff]
  %v557 = vld [vmem:[#allocation2 + $0x41] sm:$0xff]
  %v558 = vld [vmem:[#allocation2 + $0x49] sm:$0xff]
  %v559 = vld [vmem:[#allocation2 + $0x51] sm:$0xff]
  %v560 = vld [vmem:[#allocation2 + $0x59] sm:$0xff]
  %v561 = vld [vmem:[#allocation2 + $0x61] sm:$0xff]
  %v562 = vld [vmem:[#allocation2 + $0x69] sm:$0xff]
  %v563 = vld [vmem:[#allocation2 + $0x71] sm:$0xff]
  %v564 = vld [vmem:[#allocation2 + $0x79] sm:$0xff]
  %s565 = scalar_lea.vmem %s3, 56
  %v566 = vld [vmem:[%s565] sm:$0xff]
  %v567 = vld [vmem:[%s565 + $0x8] sm:$0xff]
  %v568 = vld [vmem:[%s565 + $0x10] sm:$0xff]
  %v569 = vld [vmem:[%s565 + $0x18] sm:$0xff]
  %v570 = vld [vmem:[%s565 + $0x20] sm:$0xff]
  %v571 = vld [vmem:[%s565 + $0x28] sm:$0xff]
  %v572 = vld [vmem:[%s565 + $0x30] sm:$0xff]
  %v574 = vsel %vm508, %v549, 0
  %v577 = vsel %vm508, %v550, 0
  %v580 = vsel %vm508, %v551, 0
  %v583 = vsel %vm508, %v552, 0
  %v586 = vsel %vm508, %v553, 0
  %v589 = vsel %vm508, %v554, 0
  %v592 = vsel %vm508, %v555, 0
  %v595 = vsel %vm508, %v556, 0
  %v598 = vsel %vm508, %v557, 0
  %v601 = vsel %vm508, %v558, 0
  %v604 = vsel %vm508, %v559, 0
  %v607 = vsel %vm508, %v560, 0
  %v610 = vsel %vm508, %v561, 0
  %v613 = vsel %vm508, %v562, 0
  %v616 = vsel %vm508, %v563, 0
  %v619 = vsel %vm508, %v564, 0
  %621 = vmatprep.subr.mxu0 0.0
  %622 = vmatpush1.msra.mxu0 0.0
  %623 = vmatprep.subr.mxu0 0.0
  %624 = vmatpush1.msra.mxu0 0.0
  %625 = vmatprep.subr.mxu0 0.0
  %626 = vmatpush1.msra.mxu0 0.0
  %627 = vmatprep.subr.mxu0 0.0
  %628 = vmatpush1.msra.mxu0 0.0
  %629 = vmatprep.subr.mxu0 0.0
  %630 = vmatpush1.msra.mxu0 0.0
  %631 = vmatprep.subr.mxu0 0.0
  %632 = vmatpush1.msra.mxu0 0.0
  %633 = vmatprep.subr.mxu0 0.0
  %634 = vmatpush1.msra.mxu0 0.0
  %635 = vmatprep.subr.mxu0 0.0
  %636 = vmatpush1.msra.mxu0 0.0
  %637 = vmatprep.subr.mxu0 0.0
  %638 = vmatpush1.msra.mxu0 0.0
  %639 = vmatprep.subr.mxu0 0.0
  %640 = vmatpush1.msra.mxu0 %v572
  %641 = vmatprep.subr.mxu0 0.0
  %642 = vmatpush1.msra.mxu0 %v571
  %643 = vmatprep.subr.mxu0 0.0
  %644 = vmatpush1.msra.mxu0 %v570
  %645 = vmatprep.subr.mxu0 0.0
  %646 = vmatpush1.msra.mxu0 %v569
  %647 = vmatprep.subr.mxu0 0.0
  %648 = vmatpush1.msra.mxu0 %v568
  %649 = vmatprep.subr.mxu0 0.0
  %650 = vmatpush1.msra.mxu0 %v567
  %651 = vmatprep.subr.mxu0 0.0
  %652 = vmatpush1.msra.mxu0 %v566
  %653 = vmatprep.subr.mxu0 0.0
  %654 = vmatpush2.msra.mxu0 0.0
  %655 = vmatprep.subr.mxu0 0.0
  %656 = vmatpush2.msra.mxu0 0.0
  %657 = vmatprep.subr.mxu0 0.0
  %658 = vmatpush2.msra.mxu0 0.0
  %659 = vmatprep.subr.mxu0 0.0
  %660 = vmatpush2.msra.mxu0 0.0
  %661 = vmatprep.subr.mxu0 0.0
  %662 = vmatpush2.msra.mxu0 0.0
  %663 = vmatprep.subr.mxu0 0.0
  %664 = vmatpush2.msra.mxu0 0.0
  %665 = vmatprep.subr.mxu0 0.0
  %666 = vmatpush2.msra.mxu0 0.0
  %667 = vmatprep.subr.mxu0 0.0
  %668 = vmatpush2.msra.mxu0 0.0
  %669 = vmatprep.subr.mxu0 0.0
  %670 = vmatpush2.msra.mxu0 0.0
  %671 = vmatprep.subr.mxu0 0.0
  %672 = vmatpush2.msra.mxu0 0.0
  %673 = vmatprep.subr.mxu0 0.0
  %674 = vmatpush2.msra.mxu0 0.0
  %675 = vmatprep.subr.mxu0 0.0
  %676 = vmatpush2.msra.mxu0 0.0
  %677 = vmatprep.subr.mxu0 0.0
  %678 = vmatpush2.msra.mxu0 0.0
  %679 = vmatprep.subr.mxu0 0.0
  %680 = vmatpush2.msra.mxu0 0.0
  %681 = vmatprep.subr.mxu0 0.0
  %682 = vmatpush2.msra.mxu0 0.0
  %683 = vmatprep.subr.mxu0 0.0
  %684 = vmatpush2.msra.mxu0 0.0
  %685 = vmatprep.mubr.f32.mxu0 0.0
  %686 = vmatmul.mubr.f32.gmra.mxu0 %v574
  %v687 = vpop.f32.mrf.mxu0
  %v688 = vadd.f32 0.0, %v687
  %v689 = vpop.f32.mrf.mxu0
  %690 = vmatprep.mubr.f32.mxu0 0.0
  %691 = vmatmul.mubr.f32.gmra.mxu0 %v577
  %v692 = vpop.f32.mrf.mxu0
  %v693 = vadd.f32 0.0, %v692
  %v694 = vpop.f32.mrf.mxu0
  %695 = vmatprep.mubr.f32.mxu0 0.0
  %696 = vmatmul.mubr.f32.gmra.mxu0 %v580
  %v697 = vpop.f32.mrf.mxu0
  %v698 = vadd.f32 0.0, %v697
  %v699 = vpop.f32.mrf.mxu0
  %700 = vmatprep.mubr.f32.mxu0 0.0
  %701 = vmatmul.mubr.f32.gmra.mxu0 %v583
  %v702 = vpop.f32.mrf.mxu0
  %v703 = vadd.f32 0.0, %v702
  %v704 = vpop.f32.mrf.mxu0
  %705 = vmatprep.mubr.f32.mxu0 0.0
  %706 = vmatmul.mubr.f32.gmra.mxu0 %v586
  %v707 = vpop.f32.mrf.mxu0
  %v708 = vadd.f32 0.0, %v707
  %v709 = vpop.f32.mrf.mxu0
  %710 = vmatprep.mubr.f32.mxu0 0.0
  %711 = vmatmul.mubr.f32.gmra.mxu0 %v589
  %v712 = vpop.f32.mrf.mxu0
  %v713 = vadd.f32 0.0, %v712
  %v714 = vpop.f32.mrf.mxu0
  %715 = vmatprep.mubr.f32.mxu0 0.0
  %716 = vmatmul.mubr.f32.gmra.mxu0 %v592
  %v717 = vpop.f32.mrf.mxu0
  %v718 = vadd.f32 0.0, %v717
  %v719 = vpop.f32.mrf.mxu0
  %720 = vmatprep.mubr.f32.mxu0 0.0
  %721 = vmatmul.mubr.f32.gmra.mxu0 %v595
  %v722 = vpop.f32.mrf.mxu0
  %v723 = vadd.f32 0.0, %v722
  %v724 = vpop.f32.mrf.mxu0
  %725 = vmatprep.mubr.f32.mxu0 0.0
  %726 = vmatmul.mubr.f32.gmra.mxu0 %v598
  %v727 = vpop.f32.mrf.mxu0
  %v728 = vadd.f32 0.0, %v727
  %v729 = vpop.f32.mrf.mxu0
  %730 = vmatprep.mubr.f32.mxu0 0.0
  %731 = vmatmul.mubr.f32.gmra.mxu0 %v601
  %v732 = vpop.f32.mrf.mxu0
  %v733 = vadd.f32 0.0, %v732
  %v734 = vpop.f32.mrf.mxu0
  %735 = vmatprep.mubr.f32.mxu0 0.0
  %736 = vmatmul.mubr.f32.gmra.mxu0 %v604
  %v737 = vpop.f32.mrf.mxu0
  %v738 = vadd.f32 0.0, %v737
  %v739 = vpop.f32.mrf.mxu0
  %740 = vmatprep.mubr.f32.mxu0 0.0
  %741 = vmatmul.mubr.f32.gmra.mxu0 %v607
  %v742 = vpop.f32.mrf.mxu0
  %v743 = vadd.f32 0.0, %v742
  %v744 = vpop.f32.mrf.mxu0
  %745 = vmatprep.mubr.f32.mxu0 0.0
  %746 = vmatmul.mubr.f32.gmra.mxu0 %v610
  %v747 = vpop.f32.mrf.mxu0
  %v748 = vadd.f32 0.0, %v747
  %v749 = vpop.f32.mrf.mxu0
  %750 = vmatprep.mubr.f32.mxu0 0.0
  %751 = vmatmul.mubr.f32.gmra.mxu0 %v613
  %v752 = vpop.f32.mrf.mxu0
  %v753 = vadd.f32 0.0, %v752
  %v754 = vpop.f32.mrf.mxu0
  %755 = vmatprep.mubr.f32.mxu0 0.0
  %756 = vmatmul.mubr.f32.gmra.mxu0 %v616
  %v757 = vpop.f32.mrf.mxu0
  %v758 = vadd.f32 0.0, %v757
  %v759 = vpop.f32.mrf.mxu0
  %760 = vmatprep.mubr.f32.mxu0 0.0
  %761 = vmatmul.mubr.f32.gmra.mxu0 %v619
  %v762 = vpop.f32.mrf.mxu0
  %v763 = vadd.f32 0.0, %v762
  %v764 = vpop.f32.mrf.mxu0
  %765 = vdwg.mxu0
  %v766 = vld [vmem:[#allocation2 + $0x2] sm:$0xff]
  %v767 = vld [vmem:[#allocation2 + $0xa] sm:$0xff]
  %v768 = vld [vmem:[#allocation2 + $0x12] sm:$0xff]
  %v769 = vld [vmem:[#allocation2 + $0x1a] sm:$0xff]
  %v770 = vld [vmem:[#allocation2 + $0x22] sm:$0xff]
  %v771 = vld [vmem:[#allocation2 + $0x2a] sm:$0xff]
  %v772 = vld [vmem:[#allocation2 + $0x32] sm:$0xff]
  %v773 = vld [vmem:[#allocation2 + $0x3a] sm:$0xff]
  %v774 = vld [vmem:[#allocation2 + $0x42] sm:$0xff]
  %v775 = vld [vmem:[#allocation2 + $0x4a] sm:$0xff]
  %v776 = vld [vmem:[#allocation2 + $0x52] sm:$0xff]
  %v777 = vld [vmem:[#allocation2 + $0x5a] sm:$0xff]
  %v778 = vld [vmem:[#allocation2 + $0x62] sm:$0xff]
  %v779 = vld [vmem:[#allocation2 + $0x6a] sm:$0xff]
  %v780 = vld [vmem:[#allocation2 + $0x72] sm:$0xff]
  %v781 = vld [vmem:[#allocation2 + $0x7a] sm:$0xff]
  %s782 = scalar_lea.vmem %s3, 112
  %v783 = vld [vmem:[%s782] sm:$0xff]
  %v784 = vld [vmem:[%s782 + $0x8] sm:$0xff]
  %v785 = vld [vmem:[%s782 + $0x10] sm:$0xff]
  %v786 = vld [vmem:[%s782 + $0x18] sm:$0xff]
  %v787 = vld [vmem:[%s782 + $0x20] sm:$0xff]
  %v788 = vld [vmem:[%s782 + $0x28] sm:$0xff]
  %v789 = vld [vmem:[%s782 + $0x30] sm:$0xff]
  %v790 = vld [vmem:[#allocation2 + $0x3] sm:$0xff]
  %v791 = vld [vmem:[#allocation2 + $0xb] sm:$0xff]
  %v792 = vld [vmem:[#allocation2 + $0x13] sm:$0xff]
  %v793 = vld [vmem:[#allocation2 + $0x1b] sm:$0xff]
  %v794 = vld [vmem:[#allocation2 + $0x23] sm:$0xff]
  %v795 = vld [vmem:[#allocation2 + $0x2b] sm:$0xff]
  %v796 = vld [vmem:[#allocation2 + $0x33] sm:$0xff]
  %v797 = vld [vmem:[#allocation2 + $0x3b] sm:$0xff]
  %v798 = vld [vmem:[#allocation2 + $0x43] sm:$0xff]
  %v799 = vld [vmem:[#allocation2 + $0x4b] sm:$0xff]
  %v800 = vld [vmem:[#allocation2 + $0x53] sm:$0xff]
  %v801 = vld [vmem:[#allocation2 + $0x5b] sm:$0xff]
  %v802 = vld [vmem:[#allocation2 + $0x63] sm:$0xff]
  %v803 = vld [vmem:[#allocation2 + $0x6b] sm:$0xff]
  %v804 = vld [vmem:[#allocation2 + $0x73] sm:$0xff]
  %v805 = vld [vmem:[#allocation2 + $0x7b] sm:$0xff]
  %s806 = scalar_lea.vmem %s3, 168
  %v807 = vld [vmem:[%s806] sm:$0xff]
  %v808 = vld [vmem:[%s806 + $0x8] sm:$0xff]
  %v809 = vld [vmem:[%s806 + $0x10] sm:$0xff]
  %v810 = vld [vmem:[%s806 + $0x18] sm:$0xff]
  %v811 = vld [vmem:[%s806 + $0x20] sm:$0xff]
  %v812 = vld [vmem:[%s806 + $0x28] sm:$0xff]
  %v813 = vld [vmem:[%s806 + $0x30] sm:$0xff]
  %v815 = vsel %vm508, %v790, 0
  %v818 = vsel %vm508, %v791, 0
  %v821 = vsel %vm508, %v792, 0
  %v824 = vsel %vm508, %v793, 0
  %v827 = vsel %vm508, %v794, 0
  %v830 = vsel %vm508, %v795, 0
  %v833 = vsel %vm508, %v796, 0
  %v836 = vsel %vm508, %v797, 0
  %v839 = vsel %vm508, %v798, 0
  %v842 = vsel %vm508, %v799, 0
  %v845 = vsel %vm508, %v800, 0
  %v848 = vsel %vm508, %v801, 0
  %v851 = vsel %vm508, %v802, 0
  %v854 = vsel %vm508, %v803, 0
  %v857 = vsel %vm508, %v804, 0
  %v860 = vsel %vm508, %v805, 0
  %862 = vmatprep.subr.mxu0 0.0
  %863 = vmatpush1.msra.mxu0 0.0
  %864 = vmatprep.subr.mxu0 0.0
  %865 = vmatpush1.msra.mxu0 0.0
  %866 = vmatprep.subr.mxu0 0.0
  %867 = vmatpush1.msra.mxu0 0.0
  %868 = vmatprep.subr.mxu0 0.0
  %869 = vmatpush1.msra.mxu0 0.0
  %870 = vmatprep.subr.mxu0 0.0
  %871 = vmatpush1.msra.mxu0 0.0
  %872 = vmatprep.subr.mxu0 0.0
  %873 = vmatpush1.msra.mxu0 0.0
  %874 = vmatprep.subr.mxu0 0.0
  %875 = vmatpush1.msra.mxu0 0.0
  %876 = vmatprep.subr.mxu0 0.0
  %877 = vmatpush1.msra.mxu0 0.0
  %878 = vmatprep.subr.mxu0 0.0
  %879 = vmatpush1.msra.mxu0 0.0
  %880 = vmatprep.subr.mxu0 0.0
  %881 = vmatpush1.msra.mxu0 %v813
  %882 = vmatprep.subr.mxu0 0.0
  %883 = vmatpush1.msra.mxu0 %v812
  %884 = vmatprep.subr.mxu0 0.0
  %885 = vmatpush1.msra.mxu0 %v811
  %886 = vmatprep.subr.mxu0 0.0
  %887 = vmatpush1.msra.mxu0 %v810
  %888 = vmatprep.subr.mxu0 0.0
  %889 = vmatpush1.msra.mxu0 %v809
  %890 = vmatprep.subr.mxu0 0.0
  %891 = vmatpush1.msra.mxu0 %v808
  %892 = vmatprep.subr.mxu0 0.0
  %893 = vmatpush1.msra.mxu0 %v807
  %894 = vmatprep.subr.mxu0 0.0
  %895 = vmatpush2.msra.mxu0 0.0
  %896 = vmatprep.subr.mxu0 0.0
  %897 = vmatpush2.msra.mxu0 0.0
  %898 = vmatprep.subr.mxu0 0.0
  %899 = vmatpush2.msra.mxu0 0.0
  %900 = vmatprep.subr.mxu0 0.0
  %901 = vmatpush2.msra.mxu0 0.0
  %902 = vmatprep.subr.mxu0 0.0
  %903 = vmatpush2.msra.mxu0 0.0
  %904 = vmatprep.subr.mxu0 0.0
  %905 = vmatpush2.msra.mxu0 0.0
  %906 = vmatprep.subr.mxu0 0.0
  %907 = vmatpush2.msra.mxu0 0.0
  %908 = vmatprep.subr.mxu0 0.0
  %909 = vmatpush2.msra.mxu0 0.0
  %910 = vmatprep.subr.mxu0 0.0
  %911 = vmatpush2.msra.mxu0 0.0
  %912 = vmatprep.subr.mxu0 0.0
  %913 = vmatpush2.msra.mxu0 0.0
  %914 = vmatprep.subr.mxu0 0.0
  %915 = vmatpush2.msra.mxu0 0.0
  %916 = vmatprep.subr.mxu0 0.0
  %917 = vmatpush2.msra.mxu0 0.0
  %918 = vmatprep.subr.mxu0 0.0
  %919 = vmatpush2.msra.mxu0 0.0
  %920 = vmatprep.subr.mxu0 0.0
  %921 = vmatpush2.msra.mxu0 0.0
  %922 = vmatprep.subr.mxu0 0.0
  %923 = vmatpush2.msra.mxu0 0.0
  %924 = vmatprep.subr.mxu0 0.0
  %925 = vmatpush2.msra.mxu0 0.0
  %926 = vmatprep.mubr.f32.mxu0 0.0
  %927 = vmatmul.mubr.f32.gmra.mxu0 %v815
  %v928 = vpop.f32.mrf.mxu0
  %v929 = vadd.f32 0.0, %v928
  %v930 = vpop.f32.mrf.mxu0
  %931 = vmatprep.mubr.f32.mxu0 0.0
  %932 = vmatmul.mubr.f32.gmra.mxu0 %v818
  %v933 = vpop.f32.mrf.mxu0
  %v934 = vadd.f32 0.0, %v933
  %v935 = vpop.f32.mrf.mxu0
  %936 = vmatprep.mubr.f32.mxu0 0.0
  %937 = vmatmul.mubr.f32.gmra.mxu0 %v821
  %v938 = vpop.f32.mrf.mxu0
  %v939 = vadd.f32 0.0, %v938
  %v940 = vpop.f32.mrf.mxu0
  %941 = vmatprep.mubr.f32.mxu0 0.0
  %942 = vmatmul.mubr.f32.gmra.mxu0 %v824
  %v943 = vpop.f32.mrf.mxu0
  %v944 = vadd.f32 0.0, %v943
  %v945 = vpop.f32.mrf.mxu0
  %946 = vmatprep.mubr.f32.mxu0 0.0
  %947 = vmatmul.mubr.f32.gmra.mxu0 %v827
  %v948 = vpop.f32.mrf.mxu0
  %v949 = vadd.f32 0.0, %v948
  %v950 = vpop.f32.mrf.mxu0
  %951 = vmatprep.mubr.f32.mxu0 0.0
  %952 = vmatmul.mubr.f32.gmra.mxu0 %v830
  %v953 = vpop.f32.mrf.mxu0
  %v954 = vadd.f32 0.0, %v953
  %v955 = vpop.f32.mrf.mxu0
  %956 = vmatprep.mubr.f32.mxu0 0.0
  %957 = vmatmul.mubr.f32.gmra.mxu0 %v833
  %v958 = vpop.f32.mrf.mxu0
  %v959 = vadd.f32 0.0, %v958
  %v960 = vpop.f32.mrf.mxu0
  %961 = vmatprep.mubr.f32.mxu0 0.0
  %962 = vmatmul.mubr.f32.gmra.mxu0 %v836
  %v963 = vpop.f32.mrf.mxu0
  %v964 = vadd.f32 0.0, %v963
  %v965 = vpop.f32.mrf.mxu0
  %966 = vmatprep.mubr.f32.mxu0 0.0
  %967 = vmatmul.mubr.f32.gmra.mxu0 %v839
  %v968 = vpop.f32.mrf.mxu0
  %v969 = vadd.f32 0.0, %v968
  %v970 = vpop.f32.mrf.mxu0
  %971 = vmatprep.mubr.f32.mxu0 0.0
  %972 = vmatmul.mubr.f32.gmra.mxu0 %v842
  %v973 = vpop.f32.mrf.mxu0
  %v974 = vadd.f32 0.0, %v973
  %v975 = vpop.f32.mrf.mxu0
  %976 = vmatprep.mubr.f32.mxu0 0.0
  %977 = vmatmul.mubr.f32.gmra.mxu0 %v845
  %v978 = vpop.f32.mrf.mxu0
  %v979 = vadd.f32 0.0, %v978
  %v980 = vpop.f32.mrf.mxu0
  %981 = vmatprep.mubr.f32.mxu0 0.0
  %982 = vmatmul.mubr.f32.gmra.mxu0 %v848
  %v983 = vpop.f32.mrf.mxu0
  %v984 = vadd.f32 0.0, %v983
  %v985 = vpop.f32.mrf.mxu0
  %986 = vmatprep.mubr.f32.mxu0 0.0
  %987 = vmatmul.mubr.f32.gmra.mxu0 %v851
  %v988 = vpop.f32.mrf.mxu0
  %v989 = vadd.f32 0.0, %v988
  %v990 = vpop.f32.mrf.mxu0
  %991 = vmatprep.mubr.f32.mxu0 0.0
  %992 = vmatmul.mubr.f32.gmra.mxu0 %v854
  %v993 = vpop.f32.mrf.mxu0
  %v994 = vadd.f32 0.0, %v993
  %v995 = vpop.f32.mrf.mxu0
  %996 = vmatprep.mubr.f32.mxu0 0.0
  %997 = vmatmul.mubr.f32.gmra.mxu0 %v857
  %v998 = vpop.f32.mrf.mxu0
  %v999 = vadd.f32 0.0, %v998
  %v1000 = vpop.f32.mrf.mxu0
  %1001 = vmatprep.mubr.f32.mxu0 0.0
  %1002 = vmatmul.mubr.f32.gmra.mxu0 %v860
  %v1003 = vpop.f32.mrf.mxu0
  %v1004 = vadd.f32 0.0, %v1003
  %v1005 = vpop.f32.mrf.mxu0
  %1006 = vdwg.mxu0
  %v1008 = vsel %vm508, %v526, 0
  %v1011 = vsel %vm508, %v527, 0
  %v1014 = vsel %vm508, %v528, 0
  %v1017 = vsel %vm508, %v529, 0
  %v1020 = vsel %vm508, %v530, 0
  %v1023 = vsel %vm508, %v531, 0
  %v1026 = vsel %vm508, %v532, 0
  %v1029 = vsel %vm508, %v533, 0
  %v1032 = vsel %vm508, %v534, 0
  %v1035 = vsel %vm508, %v535, 0
  %v1038 = vsel %vm508, %v536, 0
  %v1041 = vsel %vm508, %v537, 0
  %v1044 = vsel %vm508, %v538, 0
  %v1047 = vsel %vm508, %v539, 0
  %v1050 = vsel %vm508, %v540, 0
  %v1053 = vsel %vm508, %v541, 0
  %1055 = vmatprep.subr.mxu0 0.0
  %1056 = vmatpush1.msra.mxu0 0.0
  %1057 = vmatprep.subr.mxu0 0.0
  %1058 = vmatpush1.msra.mxu0 0.0
  %1059 = vmatprep.subr.mxu0 0.0
  %1060 = vmatpush1.msra.mxu0 0.0
  %1061 = vmatprep.subr.mxu0 0.0
  %1062 = vmatpush1.msra.mxu0 0.0
  %1063 = vmatprep.subr.mxu0 0.0
  %1064 = vmatpush1.msra.mxu0 0.0
  %1065 = vmatprep.subr.mxu0 0.0
  %1066 = vmatpush1.msra.mxu0 0.0
  %1067 = vmatprep.subr.mxu0 0.0
  %1068 = vmatpush1.msra.mxu0 0.0
  %1069 = vmatprep.subr.mxu0 0.0
  %1070 = vmatpush1.msra.mxu0 0.0
  %1071 = vmatprep.subr.mxu0 0.0
  %1072 = vmatpush1.msra.mxu0 0.0
  %1073 = vmatprep.subr.mxu0 0.0
  %1074 = vmatpush1.msra.mxu0 %v548
  %1075 = vmatprep.subr.mxu0 0.0
  %1076 = vmatpush1.msra.mxu0 %v547
  %1077 = vmatprep.subr.mxu0 0.0
  %1078 = vmatpush1.msra.mxu0 %v546
  %1079 = vmatprep.subr.mxu0 0.0
  %1080 = vmatpush1.msra.mxu0 %v545
  %1081 = vmatprep.subr.mxu0 0.0
  %1082 = vmatpush1.msra.mxu0 %v544
  %1083 = vmatprep.subr.mxu0 0.0
  %1084 = vmatpush1.msra.mxu0 %v543
  %1085 = vmatprep.subr.mxu0 0.0
  %1086 = vmatpush1.msra.mxu0 %v542
  %1087 = vmatprep.subr.mxu0 0.0
  %1088 = vmatpush2.msra.mxu0 0.0
  %1089 = vmatprep.subr.mxu0 0.0
  %1090 = vmatpush2.msra.mxu0 0.0
  %1091 = vmatprep.subr.mxu0 0.0
  %1092 = vmatpush2.msra.mxu0 0.0
  %1093 = vmatprep.subr.mxu0 0.0
  %1094 = vmatpush2.msra.mxu0 0.0
  %1095 = vmatprep.subr.mxu0 0.0
  %1096 = vmatpush2.msra.mxu0 0.0
  %1097 = vmatprep.subr.mxu0 0.0
  %1098 = vmatpush2.msra.mxu0 0.0
  %1099 = vmatprep.subr.mxu0 0.0
  %1100 = vmatpush2.msra.mxu0 0.0
  %1101 = vmatprep.subr.mxu0 0.0
  %1102 = vmatpush2.msra.mxu0 0.0
  %1103 = vmatprep.subr.mxu0 0.0
  %1104 = vmatpush2.msra.mxu0 0.0
  %1105 = vmatprep.subr.mxu0 0.0
  %1106 = vmatpush2.msra.mxu0 0.0
  %1107 = vmatprep.subr.mxu0 0.0
  %1108 = vmatpush2.msra.mxu0 0.0
  %1109 = vmatprep.subr.mxu0 0.0
  %1110 = vmatpush2.msra.mxu0 0.0
  %1111 = vmatprep.subr.mxu0 0.0
  %1112 = vmatpush2.msra.mxu0 0.0
  %1113 = vmatprep.subr.mxu0 0.0
  %1114 = vmatpush2.msra.mxu0 0.0
  %1115 = vmatprep.subr.mxu0 0.0
  %1116 = vmatpush2.msra.mxu0 0.0
  %1117 = vmatprep.subr.mxu0 0.0
  %1118 = vmatpush2.msra.mxu0 0.0
  %1119 = vmatprep.mubr.f32.mxu0 0.0
  %1120 = vmatmul.mubr.f32.gmra.mxu0 %v1008
  %v1121 = vpop.f32.mrf.mxu0
  %v1122 = vadd.f32 %v688, %v1121
  %v1123 = vpop.f32.mrf.mxu0
  %1124 = vmatprep.mubr.f32.mxu0 0.0
  %1125 = vmatmul.mubr.f32.gmra.mxu0 %v1011
  %v1126 = vpop.f32.mrf.mxu0
  %v1127 = vadd.f32 %v693, %v1126
  %v1128 = vpop.f32.mrf.mxu0
  %1129 = vmatprep.mubr.f32.mxu0 0.0
  %1130 = vmatmul.mubr.f32.gmra.mxu0 %v1014
  %v1131 = vpop.f32.mrf.mxu0
  %v1132 = vadd.f32 %v698, %v1131
  %v1133 = vpop.f32.mrf.mxu0
  %1134 = vmatprep.mubr.f32.mxu0 0.0
  %1135 = vmatmul.mubr.f32.gmra.mxu0 %v1017
  %v1136 = vpop.f32.mrf.mxu0
  %v1137 = vadd.f32 %v703, %v1136
  %v1138 = vpop.f32.mrf.mxu0
  %1139 = vmatprep.mubr.f32.mxu0 0.0
  %1140 = vmatmul.mubr.f32.gmra.mxu0 %v1020
  %v1141 = vpop.f32.mrf.mxu0
  %v1142 = vadd.f32 %v708, %v1141
  %v1143 = vpop.f32.mrf.mxu0
  %1144 = vmatprep.mubr.f32.mxu0 0.0
  %1145 = vmatmul.mubr.f32.gmra.mxu0 %v1023
  %v1146 = vpop.f32.mrf.mxu0
  %v1147 = vadd.f32 %v713, %v1146
  %v1148 = vpop.f32.mrf.mxu0
  %1149 = vmatprep.mubr.f32.mxu0 0.0
  %1150 = vmatmul.mubr.f32.gmra.mxu0 %v1026
  %v1151 = vpop.f32.mrf.mxu0
  %v1152 = vadd.f32 %v718, %v1151
  %v1153 = vpop.f32.mrf.mxu0
  %1154 = vmatprep.mubr.f32.mxu0 0.0
  %1155 = vmatmul.mubr.f32.gmra.mxu0 %v1029
  %v1156 = vpop.f32.mrf.mxu0
  %v1157 = vadd.f32 %v723, %v1156
  %v1158 = vpop.f32.mrf.mxu0
  %1159 = vmatprep.mubr.f32.mxu0 0.0
  %1160 = vmatmul.mubr.f32.gmra.mxu0 %v1032
  %v1161 = vpop.f32.mrf.mxu0
  %v1162 = vadd.f32 %v728, %v1161
  %v1163 = vpop.f32.mrf.mxu0
  %1164 = vmatprep.mubr.f32.mxu0 0.0
  %1165 = vmatmul.mubr.f32.gmra.mxu0 %v1035
  %v1166 = vpop.f32.mrf.mxu0
  %v1167 = vadd.f32 %v733, %v1166
  %v1168 = vpop.f32.mrf.mxu0
  %1169 = vmatprep.mubr.f32.mxu0 0.0
  %1170 = vmatmul.mubr.f32.gmra.mxu0 %v1038
  %v1171 = vpop.f32.mrf.mxu0
  %v1172 = vadd.f32 %v738, %v1171
  %v1173 = vpop.f32.mrf.mxu0
  %1174 = vmatprep.mubr.f32.mxu0 0.0
  %1175 = vmatmul.mubr.f32.gmra.mxu0 %v1041
  %v1176 = vpop.f32.mrf.mxu0
  %v1177 = vadd.f32 %v743, %v1176
  %v1178 = vpop.f32.mrf.mxu0
  %1179 = vmatprep.mubr.f32.mxu0 0.0
  %1180 = vmatmul.mubr.f32.gmra.mxu0 %v1044
  %v1181 = vpop.f32.mrf.mxu0
  %v1182 = vadd.f32 %v748, %v1181
  %v1183 = vpop.f32.mrf.mxu0
  %1184 = vmatprep.mubr.f32.mxu0 0.0
  %1185 = vmatmul.mubr.f32.gmra.mxu0 %v1047
  %v1186 = vpop.f32.mrf.mxu0
  %v1187 = vadd.f32 %v753, %v1186
  %v1188 = vpop.f32.mrf.mxu0
  %1189 = vmatprep.mubr.f32.mxu0 0.0
  %1190 = vmatmul.mubr.f32.gmra.mxu0 %v1050
  %v1191 = vpop.f32.mrf.mxu0
  %v1192 = vadd.f32 %v758, %v1191
  %v1193 = vpop.f32.mrf.mxu0
  %1194 = vmatprep.mubr.f32.mxu0 0.0
  %1195 = vmatmul.mubr.f32.gmra.mxu0 %v1053
  %v1196 = vpop.f32.mrf.mxu0
  %v1197 = vadd.f32 %v763, %v1196
  %v1198 = vpop.f32.mrf.mxu0
  %1199 = vdwg.mxu0
  %v1201 = vsel %vm508, %v766, 0
  %v1204 = vsel %vm508, %v767, 0
  %v1207 = vsel %vm508, %v768, 0
  %v1210 = vsel %vm508, %v769, 0
  %v1213 = vsel %vm508, %v770, 0
  %v1216 = vsel %vm508, %v771, 0
  %v1219 = vsel %vm508, %v772, 0
  %v1222 = vsel %vm508, %v773, 0
  %v1225 = vsel %vm508, %v774, 0
  %v1228 = vsel %vm508, %v775, 0
  %v1231 = vsel %vm508, %v776, 0
  %v1234 = vsel %vm508, %v777, 0
  %v1237 = vsel %vm508, %v778, 0
  %v1240 = vsel %vm508, %v779, 0
  %v1243 = vsel %vm508, %v780, 0
  %v1246 = vsel %vm508, %v781, 0
  %1248 = vmatprep.subr.mxu0 0.0
  %1249 = vmatpush1.msra.mxu0 0.0
  %1250 = vmatprep.subr.mxu0 0.0
  %1251 = vmatpush1.msra.mxu0 0.0
  %1252 = vmatprep.subr.mxu0 0.0
  %1253 = vmatpush1.msra.mxu0 0.0
  %1254 = vmatprep.subr.mxu0 0.0
  %1255 = vmatpush1.msra.mxu0 0.0
  %1256 = vmatprep.subr.mxu0 0.0
  %1257 = vmatpush1.msra.mxu0 0.0
  %1258 = vmatprep.subr.mxu0 0.0
  %1259 = vmatpush1.msra.mxu0 0.0
  %1260 = vmatprep.subr.mxu0 0.0
  %1261 = vmatpush1.msra.mxu0 0.0
  %1262 = vmatprep.subr.mxu0 0.0
  %1263 = vmatpush1.msra.mxu0 0.0
  %1264 = vmatprep.subr.mxu0 0.0
  %1265 = vmatpush1.msra.mxu0 0.0
  %1266 = vmatprep.subr.mxu0 0.0
  %1267 = vmatpush1.msra.mxu0 %v789
  %1268 = vmatprep.subr.mxu0 0.0
  %1269 = vmatpush1.msra.mxu0 %v788
  %1270 = vmatprep.subr.mxu0 0.0
  %1271 = vmatpush1.msra.mxu0 %v787
  %1272 = vmatprep.subr.mxu0 0.0
  %1273 = vmatpush1.msra.mxu0 %v786
  %1274 = vmatprep.subr.mxu0 0.0
  %1275 = vmatpush1.msra.mxu0 %v785
  %1276 = vmatprep.subr.mxu0 0.0
  %1277 = vmatpush1.msra.mxu0 %v784
  %1278 = vmatprep.subr.mxu0 0.0
  %1279 = vmatpush1.msra.mxu0 %v783
  %1280 = vmatprep.subr.mxu0 0.0
  %1281 = vmatpush2.msra.mxu0 0.0
  %1282 = vmatprep.subr.mxu0 0.0
  %1283 = vmatpush2.msra.mxu0 0.0
  %1284 = vmatprep.subr.mxu0 0.0
  %1285 = vmatpush2.msra.mxu0 0.0
  %1286 = vmatprep.subr.mxu0 0.0
  %1287 = vmatpush2.msra.mxu0 0.0
  %1288 = vmatprep.subr.mxu0 0.0
  %1289 = vmatpush2.msra.mxu0 0.0
  %1290 = vmatprep.subr.mxu0 0.0
  %1291 = vmatpush2.msra.mxu0 0.0
  %1292 = vmatprep.subr.mxu0 0.0
  %1293 = vmatpush2.msra.mxu0 0.0
  %1294 = vmatprep.subr.mxu0 0.0
  %1295 = vmatpush2.msra.mxu0 0.0
  %1296 = vmatprep.subr.mxu0 0.0
  %1297 = vmatpush2.msra.mxu0 0.0
  %1298 = vmatprep.subr.mxu0 0.0
  %1299 = vmatpush2.msra.mxu0 0.0
  %1300 = vmatprep.subr.mxu0 0.0
  %1301 = vmatpush2.msra.mxu0 0.0
  %1302 = vmatprep.subr.mxu0 0.0
  %1303 = vmatpush2.msra.mxu0 0.0
  %1304 = vmatprep.subr.mxu0 0.0
  %1305 = vmatpush2.msra.mxu0 0.0
  %1306 = vmatprep.subr.mxu0 0.0
  %1307 = vmatpush2.msra.mxu0 0.0
  %1308 = vmatprep.subr.mxu0 0.0
  %1309 = vmatpush2.msra.mxu0 0.0
  %1310 = vmatprep.subr.mxu0 0.0
  %1311 = vmatpush2.msra.mxu0 0.0
  %1312 = vmatprep.mubr.f32.mxu0 0.0
  %1313 = vmatmul.mubr.f32.gmra.mxu0 %v1201
  %v1314 = vpop.f32.mrf.mxu0
  %v1315 = vadd.f32 %v929, %v1314
  %v1316 = vpop.f32.mrf.mxu0
  %1317 = vmatprep.mubr.f32.mxu0 0.0
  %1318 = vmatmul.mubr.f32.gmra.mxu0 %v1204
  %v1319 = vpop.f32.mrf.mxu0
  %v1320 = vadd.f32 %v934, %v1319
  %v1321 = vpop.f32.mrf.mxu0
  %1322 = vmatprep.mubr.f32.mxu0 0.0
  %1323 = vmatmul.mubr.f32.gmra.mxu0 %v1207
  %v1324 = vpop.f32.mrf.mxu0
  %v1325 = vadd.f32 %v939, %v1324
  %v1326 = vpop.f32.mrf.mxu0
  %1327 = vmatprep.mubr.f32.mxu0 0.0
  %1328 = vmatmul.mubr.f32.gmra.mxu0 %v1210
  %v1329 = vpop.f32.mrf.mxu0
  %v1330 = vadd.f32 %v944, %v1329
  %v1331 = vpop.f32.mrf.mxu0
  %1332 = vmatprep.mubr.f32.mxu0 0.0
  %1333 = vmatmul.mubr.f32.gmra.mxu0 %v1213
  %v1334 = vpop.f32.mrf.mxu0
  %v1335 = vadd.f32 %v949, %v1334
  %v1336 = vpop.f32.mrf.mxu0
  %1337 = vmatprep.mubr.f32.mxu0 0.0
  %1338 = vmatmul.mubr.f32.gmra.mxu0 %v1216
  %v1339 = vpop.f32.mrf.mxu0
  %v1340 = vadd.f32 %v954, %v1339
  %v1341 = vpop.f32.mrf.mxu0
  %1342 = vmatprep.mubr.f32.mxu0 0.0
  %1343 = vmatmul.mubr.f32.gmra.mxu0 %v1219
  %v1344 = vpop.f32.mrf.mxu0
  %v1345 = vadd.f32 %v959, %v1344
  %v1346 = vpop.f32.mrf.mxu0
  %1347 = vmatprep.mubr.f32.mxu0 0.0
  %1348 = vmatmul.mubr.f32.gmra.mxu0 %v1222
  %v1349 = vpop.f32.mrf.mxu0
  %v1350 = vadd.f32 %v964, %v1349
  %v1351 = vpop.f32.mrf.mxu0
  %1352 = vmatprep.mubr.f32.mxu0 0.0
  %1353 = vmatmul.mubr.f32.gmra.mxu0 %v1225
  %v1354 = vpop.f32.mrf.mxu0
  %v1355 = vadd.f32 %v969, %v1354
  %v1356 = vpop.f32.mrf.mxu0
  %1357 = vmatprep.mubr.f32.mxu0 0.0
  %1358 = vmatmul.mubr.f32.gmra.mxu0 %v1228
  %v1359 = vpop.f32.mrf.mxu0
  %v1360 = vadd.f32 %v974, %v1359
  %v1361 = vpop.f32.mrf.mxu0
  %1362 = vmatprep.mubr.f32.mxu0 0.0
  %1363 = vmatmul.mubr.f32.gmra.mxu0 %v1231
  %v1364 = vpop.f32.mrf.mxu0
  %v1365 = vadd.f32 %v979, %v1364
  %v1366 = vpop.f32.mrf.mxu0
  %1367 = vmatprep.mubr.f32.mxu0 0.0
  %1368 = vmatmul.mubr.f32.gmra.mxu0 %v1234
  %v1369 = vpop.f32.mrf.mxu0
  %v1370 = vadd.f32 %v984, %v1369
  %v1371 = vpop.f32.mrf.mxu0
  %1372 = vmatprep.mubr.f32.mxu0 0.0
  %1373 = vmatmul.mubr.f32.gmra.mxu0 %v1237
  %v1374 = vpop.f32.mrf.mxu0
  %v1375 = vadd.f32 %v989, %v1374
  %v1376 = vpop.f32.mrf.mxu0
  %1377 = vmatprep.mubr.f32.mxu0 0.0
  %1378 = vmatmul.mubr.f32.gmra.mxu0 %v1240
  %v1379 = vpop.f32.mrf.mxu0
  %v1380 = vadd.f32 %v994, %v1379
  %v1381 = vpop.f32.mrf.mxu0
  %1382 = vmatprep.mubr.f32.mxu0 0.0
  %1383 = vmatmul.mubr.f32.gmra.mxu0 %v1243
  %v1384 = vpop.f32.mrf.mxu0
  %v1385 = vadd.f32 %v999, %v1384
  %v1386 = vpop.f32.mrf.mxu0
  %1387 = vmatprep.mubr.f32.mxu0 0.0
  %1388 = vmatmul.mubr.f32.gmra.mxu0 %v1246
  %v1389 = vpop.f32.mrf.mxu0
  %v1390 = vadd.f32 %v1004, %v1389
  %v1391 = vpop.f32.mrf.mxu0
  %1392 = vdwg.mxu0
  %v1393 = vadd.f32 %v1122, %v1315
  %v1394 = vadd.f32 %v1127, %v1320
  %v1395 = vadd.f32 %v1132, %v1325
  %v1396 = vadd.f32 %v1137, %v1330
  %v1397 = vadd.f32 %v1142, %v1335
  %v1398 = vadd.f32 %v1147, %v1340
  %v1399 = vadd.f32 %v1152, %v1345
  %v1400 = vadd.f32 %v1157, %v1350
  %v1401 = vadd.f32 %v1162, %v1355
  %v1402 = vadd.f32 %v1167, %v1360
  %v1403 = vadd.f32 %v1172, %v1365
  %v1404 = vadd.f32 %v1177, %v1370
  %v1405 = vadd.f32 %v1182, %v1375
  %v1406 = vadd.f32 %v1187, %v1380
  %v1407 = vadd.f32 %v1192, %v1385
  %v1408 = vadd.f32 %v1197, %v1390
  %v1409 = vld [vmem:[%s4] sm:$0x1]
  %v1411 = vlaneseq
  %v1412 = vshrl.u32 %v1411, 7
  %v1413 = vsub.s32 0, %v1412
  %v1414 = vrot.slane %v1409, %v1413
  %v1416 = vadd.f32 %v1393, %v1414
  %v1417 = vadd.f32 %v1394, %v1414
  %v1418 = vadd.f32 %v1395, %v1414
  %v1419 = vadd.f32 %v1396, %v1414
  %v1420 = vadd.f32 %v1397, %v1414
  %v1421 = vadd.f32 %v1398, %v1414
  %v1422 = vadd.f32 %v1399, %v1414
  %v1423 = vadd.f32 %v1400, %v1414
  %v1424 = vadd.f32 %v1401, %v1414
  %v1425 = vadd.f32 %v1402, %v1414
  %v1426 = vadd.f32 %v1403, %v1414
  %v1427 = vadd.f32 %v1404, %v1414
  %v1428 = vadd.f32 %v1405, %v1414
  %v1429 = vadd.f32 %v1406, %v1414
  %v1430 = vadd.f32 %v1407, %v1414
  %v1431 = vadd.f32 %v1408, %v1414
  %v1432 = vmax.f32 %v1416, 0.0
  %v1433 = vmax.f32 %v1417, 0.0
  %v1434 = vmax.f32 %v1418, 0.0
  %v1435 = vmax.f32 %v1419, 0.0
  %v1436 = vmax.f32 %v1420, 0.0
  %v1437 = vmax.f32 %v1421, 0.0
  %v1438 = vmax.f32 %v1422, 0.0
  %v1439 = vmax.f32 %v1423, 0.0
  %v1440 = vmax.f32 %v1424, 0.0
  %v1441 = vmax.f32 %v1425, 0.0
  %v1442 = vmax.f32 %v1426, 0.0
  %v1443 = vmax.f32 %v1427, 0.0
  %v1444 = vmax.f32 %v1428, 0.0
  %v1445 = vmax.f32 %v1429, 0.0
  %v1446 = vmax.f32 %v1430, 0.0
  %v1447 = vmax.f32 %v1431, 0.0
  %1448 = vst.msk [vmem:[#allocation3] sm:$0xff] %vm153, %v1432
  %1449 = vst.msk [vmem:[#allocation3 + $0x8] sm:$0xff] %vm153, %v1433
  %1450 = vst.msk [vmem:[#allocation3 + $0x10] sm:$0xff] %vm153, %v1434
  %1451 = vst.msk [vmem:[#allocation3 + $0x18] sm:$0xff] %vm153, %v1435
  %1452 = vst.msk [vmem:[#allocation3 + $0x20] sm:$0xff] %vm153, %v1436
  %1453 = vst.msk [vmem:[#allocation3 + $0x28] sm:$0xff] %vm153, %v1437
  %1454 = vst.msk [vmem:[#allocation3 + $0x30] sm:$0xff] %vm153, %v1438
  %1455 = vst.msk [vmem:[#allocation3 + $0x38] sm:$0xff] %vm153, %v1439
  %1456 = vst.msk [vmem:[#allocation3 + $0x40] sm:$0xff] %vm153, %v1440
  %1457 = vst.msk [vmem:[#allocation3 + $0x48] sm:$0xff] %vm153, %v1441
  %1458 = vst.msk [vmem:[#allocation3 + $0x50] sm:$0xff] %vm153, %v1442
  %1459 = vst.msk [vmem:[#allocation3 + $0x58] sm:$0xff] %vm153, %v1443
  %1460 = vst.msk [vmem:[#allocation3 + $0x60] sm:$0xff] %vm153, %v1444
  %1461 = vst.msk [vmem:[#allocation3 + $0x68] sm:$0xff] %vm153, %v1445
  %1462 = vst.msk [vmem:[#allocation3 + $0x70] sm:$0xff] %vm153, %v1446
  %1463 = vst.msk [vmem:[#allocation3 + $0x78] sm:$0xff] %vm153, %v1447
  %v1464 = vld [vmem:[#allocation3] ss:$16 sm:$0x3]
  %v1465 = vld [vmem:[#allocation3] ss:$16 sm:$0xc]
  %v1466 = vor.u32 %v1464, %v1465
  %v1467 = vld [vmem:[#allocation3] ss:$16 sm:$0x30]
  %v1468 = vor.u32 %v1466, %v1467
  %v1469 = vld [vmem:[#allocation3] ss:$16 sm:$0xc0]
  %v1470 = vor.u32 %v1468, %v1469
  %s1471 = scalar_lea.vmem [#allocation3], 1
  %v1472 = vld [vmem:[%s1471] ss:$16 sm:$0x3]
  %v1473 = vld [vmem:[%s1471] ss:$16 sm:$0xc]
  %v1474 = vor.u32 %v1472, %v1473
  %v1475 = vld [vmem:[%s1471] ss:$16 sm:$0x30]
  %v1476 = vor.u32 %v1474, %v1475
  %v1477 = vld [vmem:[%s1471] ss:$16 sm:$0xc0]
  %v1478 = vor.u32 %v1476, %v1477
  %s1479 = scalar_lea.vmem [#allocation3], 2
  %v1480 = vld [vmem:[%s1479] ss:$16 sm:$0x3]
  %v1481 = vld [vmem:[%s1479] ss:$16 sm:$0xc]
  %v1482 = vor.u32 %v1480, %v1481
  %v1483 = vld [vmem:[%s1479] ss:$16 sm:$0x30]
  %v1484 = vor.u32 %v1482, %v1483
  %v1485 = vld [vmem:[%s1479] ss:$16 sm:$0xc0]
  %v1486 = vor.u32 %v1484, %v1485
  %s1487 = scalar_lea.vmem [#allocation3], 3
  %v1488 = vld [vmem:[%s1487] ss:$16 sm:$0x3]
  %v1489 = vld [vmem:[%s1487] ss:$16 sm:$0xc]
  %v1490 = vor.u32 %v1488, %v1489
  %v1491 = vld [vmem:[%s1487] ss:$16 sm:$0x30]
  %v1492 = vor.u32 %v1490, %v1491
  %v1493 = vld [vmem:[%s1487] ss:$16 sm:$0xc0]
  %v1494 = vor.u32 %v1492, %v1493
  %s1495 = scalar_lea.vmem [#allocation3], 4
  %v1496 = vld [vmem:[%s1495] ss:$16 sm:$0x3]
  %v1497 = vld [vmem:[%s1495] ss:$16 sm:$0xc]
  %v1498 = vor.u32 %v1496, %v1497
  %v1499 = vld [vmem:[%s1495] ss:$16 sm:$0x30]
  %v1500 = vor.u32 %v1498, %v1499
  %v1501 = vld [vmem:[%s1495] ss:$16 sm:$0xc0]
  %v1502 = vor.u32 %v1500, %v1501
  %s1503 = scalar_lea.vmem [#allocation3], 5
  %v1504 = vld [vmem:[%s1503] ss:$16 sm:$0x3]
  %v1505 = vld [vmem:[%s1503] ss:$16 sm:$0xc]
  %v1506 = vor.u32 %v1504, %v1505
  %v1507 = vld [vmem:[%s1503] ss:$16 sm:$0x30]
  %v1508 = vor.u32 %v1506, %v1507
  %v1509 = vld [vmem:[%s1503] ss:$16 sm:$0xc0]
  %v1510 = vor.u32 %v1508, %v1509
  %s1511 = scalar_lea.vmem [#allocation3], 6
  %v1512 = vld [vmem:[%s1511] ss:$16 sm:$0x3]
  %v1513 = vld [vmem:[%s1511] ss:$16 sm:$0xc]
  %v1514 = vor.u32 %v1512, %v1513
  %v1515 = vld [vmem:[%s1511] ss:$16 sm:$0x30]
  %v1516 = vor.u32 %v1514, %v1515
  %v1517 = vld [vmem:[%s1511] ss:$16 sm:$0xc0]
  %v1518 = vor.u32 %v1516, %v1517
  %s1519 = scalar_lea.vmem [#allocation3], 7
  %v1520 = vld [vmem:[%s1519] ss:$16 sm:$0x3]
  %v1521 = vld [vmem:[%s1519] ss:$16 sm:$0xc]
  %v1522 = vor.u32 %v1520, %v1521
  %v1523 = vld [vmem:[%s1519] ss:$16 sm:$0x30]
  %v1524 = vor.u32 %v1522, %v1523
  %v1525 = vld [vmem:[%s1519] ss:$16 sm:$0xc0]
  %v1526 = vor.u32 %v1524, %v1525
  %s1527 = scalar_lea.vmem [#allocation3], 8
  %v1528 = vld [vmem:[%s1527] ss:$16 sm:$0x3]
  %v1529 = vld [vmem:[%s1527] ss:$16 sm:$0xc]
  %v1530 = vor.u32 %v1528, %v1529
  %v1531 = vld [vmem:[%s1527] ss:$16 sm:$0x30]
  %v1532 = vor.u32 %v1530, %v1531
  %v1533 = vld [vmem:[%s1527] ss:$16 sm:$0xc0]
  %v1534 = vor.u32 %v1532, %v1533
  %s1535 = scalar_lea.vmem [#allocation3], 9
  %v1536 = vld [vmem:[%s1535] ss:$16 sm:$0x3]
  %v1537 = vld [vmem:[%s1535] ss:$16 sm:$0xc]
  %v1538 = vor.u32 %v1536, %v1537
  %v1539 = vld [vmem:[%s1535] ss:$16 sm:$0x30]
  %v1540 = vor.u32 %v1538, %v1539
  %v1541 = vld [vmem:[%s1535] ss:$16 sm:$0xc0]
  %v1542 = vor.u32 %v1540, %v1541
  %s1543 = scalar_lea.vmem [#allocation3], 10
  %v1544 = vld [vmem:[%s1543] ss:$16 sm:$0x3]
  %v1545 = vld [vmem:[%s1543] ss:$16 sm:$0xc]
  %v1546 = vor.u32 %v1544, %v1545
  %v1547 = vld [vmem:[%s1543] ss:$16 sm:$0x30]
  %v1548 = vor.u32 %v1546, %v1547
  %v1549 = vld [vmem:[%s1543] ss:$16 sm:$0xc0]
  %v1550 = vor.u32 %v1548, %v1549
  %s1551 = scalar_lea.vmem [#allocation3], 11
  %v1552 = vld [vmem:[%s1551] ss:$16 sm:$0x3]
  %v1553 = vld [vmem:[%s1551] ss:$16 sm:$0xc]
  %v1554 = vor.u32 %v1552, %v1553
  %v1555 = vld [vmem:[%s1551] ss:$16 sm:$0x30]
  %v1556 = vor.u32 %v1554, %v1555
  %v1557 = vld [vmem:[%s1551] ss:$16 sm:$0xc0]
  %v1558 = vor.u32 %v1556, %v1557
  %1560 = vrot.lane.b32.xlu0 %v1478, 64
  %v1561 = vpop.permute.xlu0 %1560
  %1564 = vrot.lane.b32.xlu0 %v1494, 64
  %v1565 = vpop.permute.xlu0 %1564
  %1568 = vrot.lane.b32.xlu0 %v1510, 64
  %v1569 = vpop.permute.xlu0 %1568
  %1572 = vrot.lane.b32.xlu0 %v1526, 64
  %v1573 = vpop.permute.xlu0 %1572
  %1576 = vrot.lane.b32.xlu0 %v1542, 64
  %v1577 = vpop.permute.xlu0 %1576
  %1580 = vrot.lane.b32.xlu0 %v1558, 64
  %v1581 = vpop.permute.xlu0 %1580
  %v1583 = vsel %vm153, %v1470, %v1561
  %v1584 = vsel %vm153, %v1486, %v1565
  %v1585 = vsel %vm153, %v1502, %v1569
  %v1586 = vsel %vm153, %v1518, %v1573
  %v1587 = vsel %vm153, %v1534, %v1577
  %v1588 = vsel %vm153, %v1550, %v1581
  %v1589 = vld [vmem:[%s5] sm:$0xff]
  %v1590 = vld [vmem:[%s5 + $0x8] sm:$0xff]
  %v1591 = vld [vmem:[%s5 + $0x10] sm:$0xff]
  %v1592 = vld [vmem:[%s5 + $0x18] sm:$0xff]
  %v1593 = vld [vmem:[%s5 + $0x20] sm:$0xff]
  %v1594 = vld [vmem:[%s5 + $0x28] sm:$0xff]
  %v1595 = vld [vmem:[%s5 + $0x30] sm:$0xff]
  %v1596 = vld [vmem:[%s5 + $0x38] sm:$0xff]
  %v1597 = vld [vmem:[%s5 + $0x40] sm:$0xff]
  %v1598 = vld [vmem:[%s5 + $0x48] sm:$0xff]
  %v1599 = vld [vmem:[%s5 + $0x50] sm:$0xff]
  %v1600 = vld [vmem:[%s5 + $0x58] sm:$0xff]
  %v1601 = vld [vmem:[%s5 + $0x60] sm:$0xff]
  %v1602 = vld [vmem:[%s5 + $0x68] sm:$0xff]
  %v1603 = vld [vmem:[%s5 + $0x70] sm:$0xff]
  %v1604 = vld [vmem:[%s5 + $0x78] sm:$0xff]
  %v1605 = vld [vmem:[%s5 + $0x80] sm:$0xff]
  %v1606 = vld [vmem:[%s5 + $0x88] sm:$0xff]
  %v1607 = vld [vmem:[%s5 + $0x90] sm:$0xff]
  %v1608 = vld [vmem:[%s5 + $0x98] sm:$0xff]
  %v1609 = vld [vmem:[%s5 + $0xa0] sm:$0xff]
  %v1610 = vld [vmem:[%s5 + $0xa8] sm:$0xff]
  %v1611 = vld [vmem:[%s5 + $0xb0] sm:$0xff]
  %v1612 = vld [vmem:[%s5 + $0xb8] sm:$0xff]
  %v1613 = vld [vmem:[%s5 + $0xc0] sm:$0xff]
  %v1614 = vld [vmem:[%s5 + $0xc8] sm:$0xff]
  %v1615 = vld [vmem:[%s5 + $0xd0] sm:$0xff]
  %v1616 = vld [vmem:[%s5 + $0xd8] sm:$0xff]
  %v1617 = vld [vmem:[%s5 + $0xe0] sm:$0xff]
  %v1618 = vld [vmem:[%s5 + $0xe8] sm:$0xff]
  %v1619 = vld [vmem:[%s5 + $0xf0] sm:$0xff]
  %v1620 = vld [vmem:[%s5 + $0xf8] sm:$0xff]
  %v1621 = vld [vmem:[%s5 + $0x100] sm:$0xff]
  %v1622 = vld [vmem:[%s5 + $0x108] sm:$0xff]
  %v1623 = vld [vmem:[%s5 + $0x110] sm:$0xff]
  %v1624 = vld [vmem:[%s5 + $0x118] sm:$0xff]
  %v1625 = vld [vmem:[%s5 + $0x120] sm:$0xff]
  %v1626 = vld [vmem:[%s5 + $0x128] sm:$0xff]
  %v1627 = vld [vmem:[%s5 + $0x130] sm:$0xff]
  %v1628 = vld [vmem:[%s5 + $0x138] sm:$0xff]
  %v1629 = vld [vmem:[%s5 + $0x140] sm:$0xff]
  %v1630 = vld [vmem:[%s5 + $0x148] sm:$0xff]
  %v1631 = vld [vmem:[%s5 + $0x150] sm:$0xff]
  %v1632 = vld [vmem:[%s5 + $0x158] sm:$0xff]
  %v1633 = vld [vmem:[%s5 + $0x160] sm:$0xff]
  %v1634 = vld [vmem:[%s5 + $0x168] sm:$0xff]
  %v1635 = vld [vmem:[%s5 + $0x170] sm:$0xff]
  %v1636 = vld [vmem:[%s5 + $0x178] sm:$0xff]
  %v1637 = vld [vmem:[%s5 + $0x180] sm:$0xff]
  %v1638 = vld [vmem:[%s5 + $0x188] sm:$0xff]
  %v1639 = vld [vmem:[%s5 + $0x190] sm:$0xff]
  %v1640 = vld [vmem:[%s5 + $0x198] sm:$0xff]
  %v1641 = vld [vmem:[%s5 + $0x1a0] sm:$0xff]
  %v1642 = vld [vmem:[%s5 + $0x1a8] sm:$0xff]
  %v1643 = vld [vmem:[%s5 + $0x1b0] sm:$0xff]
  %v1644 = vld [vmem:[%s5 + $0x1b8] sm:$0xff]
  %v1645 = vld [vmem:[%s5 + $0x1c0] sm:$0xff]
  %v1646 = vld [vmem:[%s5 + $0x1c8] sm:$0xff]
  %v1647 = vld [vmem:[%s5 + $0x1d0] sm:$0xff]
  %v1648 = vld [vmem:[%s5 + $0x1d8] sm:$0xff]
  %v1649 = vld [vmem:[%s5 + $0x1e0] sm:$0xff]
  %v1650 = vld [vmem:[%s5 + $0x1e8] sm:$0xff]
  %v1651 = vld [vmem:[%s5 + $0x1f0] sm:$0xff]
  %v1652 = vld [vmem:[%s5 + $0x1f8] sm:$0xff]
  %v1653 = vld [vmem:[%s5 + $0x200] sm:$0xff]
  %v1654 = vld [vmem:[%s5 + $0x208] sm:$0xff]
  %v1655 = vld [vmem:[%s5 + $0x210] sm:$0xff]
  %v1656 = vld [vmem:[%s5 + $0x218] sm:$0xff]
  %v1657 = vld [vmem:[%s5 + $0x220] sm:$0xff]
  %v1658 = vld [vmem:[%s5 + $0x228] sm:$0xff]
  %v1659 = vld [vmem:[%s5 + $0x230] sm:$0xff]
  %v1660 = vld [vmem:[%s5 + $0x238] sm:$0xff]
  %v1661 = vld [vmem:[%s5 + $0x240] sm:$0xff]
  %v1662 = vld [vmem:[%s5 + $0x248] sm:$0xff]
  %v1663 = vld [vmem:[%s5 + $0x250] sm:$0xff]
  %v1664 = vld [vmem:[%s5 + $0x258] sm:$0xff]
  %v1665 = vld [vmem:[%s5 + $0x260] sm:$0xff]
  %v1666 = vld [vmem:[%s5 + $0x268] sm:$0xff]
  %v1667 = vld [vmem:[%s5 + $0x270] sm:$0xff]
  %v1668 = vld [vmem:[%s5 + $0x278] sm:$0xff]
  %v1669 = vld [vmem:[%s5 + $0x280] sm:$0xff]
  %v1670 = vld [vmem:[%s5 + $0x288] sm:$0xff]
  %v1671 = vld [vmem:[%s5 + $0x290] sm:$0xff]
  %v1672 = vld [vmem:[%s5 + $0x298] sm:$0xff]
  %v1673 = vld [vmem:[%s5 + $0x2a0] sm:$0xff]
  %v1674 = vld [vmem:[%s5 + $0x2a8] sm:$0xff]
  %v1675 = vld [vmem:[%s5 + $0x2b0] sm:$0xff]
  %v1676 = vld [vmem:[%s5 + $0x2b8] sm:$0xff]
  %v1677 = vld [vmem:[%s5 + $0x2c0] sm:$0xff]
  %v1678 = vld [vmem:[%s5 + $0x2c8] sm:$0xff]
  %v1679 = vld [vmem:[%s5 + $0x2d0] sm:$0xff]
  %v1680 = vld [vmem:[%s5 + $0x2d8] sm:$0xff]
  %v1681 = vld [vmem:[%s5 + $0x2e0] sm:$0xff]
  %v1682 = vld [vmem:[%s5 + $0x2e8] sm:$0xff]
  %v1683 = vld [vmem:[%s5 + $0x2f0] sm:$0xff]
  %v1684 = vld [vmem:[%s5 + $0x2f8] sm:$0xff]
  %v1685 = vld [vmem:[%s6] sm:$0x1]
  %v1687 = vlaneseq
  %v1688 = vshrl.u32 %v1687, 7
  %v1689 = vsub.s32 0, %v1688
  %v1690 = vrot.slane %v1685, %v1689
  %1692 = vmatprep.subr.mxu0 0.0
  %1693 = vmatpush1.msra.mxu0 %v1604
  %1694 = vmatprep.subr.mxu0 0.0
  %1695 = vmatpush1.msra.mxu0 %v1603
  %1696 = vmatprep.subr.mxu0 0.0
  %1697 = vmatpush1.msra.mxu0 %v1602
  %1698 = vmatprep.subr.mxu0 0.0
  %1699 = vmatpush1.msra.mxu0 %v1601
  %1700 = vmatprep.subr.mxu0 0.0
  %1701 = vmatpush1.msra.mxu0 %v1600
  %1702 = vmatprep.subr.mxu0 0.0
  %1703 = vmatpush1.msra.mxu0 %v1599
  %1704 = vmatprep.subr.mxu0 0.0
  %1705 = vmatpush1.msra.mxu0 %v1598
  %1706 = vmatprep.subr.mxu0 0.0
  %1707 = vmatpush1.msra.mxu0 %v1597
  %1708 = vmatprep.subr.mxu0 0.0
  %1709 = vmatpush1.msra.mxu0 %v1596
  %1710 = vmatprep.subr.mxu0 0.0
  %1711 = vmatpush1.msra.mxu0 %v1595
  %1712 = vmatprep.subr.mxu0 0.0
  %1713 = vmatpush1.msra.mxu0 %v1594
  %1714 = vmatprep.subr.mxu0 0.0
  %1715 = vmatpush1.msra.mxu0 %v1593
  %1716 = vmatprep.subr.mxu0 0.0
  %1717 = vmatpush1.msra.mxu0 %v1592
  %1718 = vmatprep.subr.mxu0 0.0
  %1719 = vmatpush1.msra.mxu0 %v1591
  %1720 = vmatprep.subr.mxu0 0.0
  %1721 = vmatpush1.msra.mxu0 %v1590
  %1722 = vmatprep.subr.mxu0 0.0
  %1723 = vmatpush1.msra.mxu0 %v1589
  %1724 = vmatprep.subr.mxu0 0.0
  %1725 = vmatpush2.msra.mxu0 %v1620
  %1726 = vmatprep.subr.mxu0 0.0
  %1727 = vmatpush2.msra.mxu0 %v1619
  %1728 = vmatprep.subr.mxu0 0.0
  %1729 = vmatpush2.msra.mxu0 %v1618
  %1730 = vmatprep.subr.mxu0 0.0
  %1731 = vmatpush2.msra.mxu0 %v1617
  %1732 = vmatprep.subr.mxu0 0.0
  %1733 = vmatpush2.msra.mxu0 %v1616
  %1734 = vmatprep.subr.mxu0 0.0
  %1735 = vmatpush2.msra.mxu0 %v1615
  %1736 = vmatprep.subr.mxu0 0.0
  %1737 = vmatpush2.msra.mxu0 %v1614
  %1738 = vmatprep.subr.mxu0 0.0
  %1739 = vmatpush2.msra.mxu0 %v1613
  %1740 = vmatprep.subr.mxu0 0.0
  %1741 = vmatpush2.msra.mxu0 %v1612
  %1742 = vmatprep.subr.mxu0 0.0
  %1743 = vmatpush2.msra.mxu0 %v1611
  %1744 = vmatprep.subr.mxu0 0.0
  %1745 = vmatpush2.msra.mxu0 %v1610
  %1746 = vmatprep.subr.mxu0 0.0
  %1747 = vmatpush2.msra.mxu0 %v1609
  %1748 = vmatprep.subr.mxu0 0.0
  %1749 = vmatpush2.msra.mxu0 %v1608
  %1750 = vmatprep.subr.mxu0 0.0
  %1751 = vmatpush2.msra.mxu0 %v1607
  %1752 = vmatprep.subr.mxu0 0.0
  %1753 = vmatpush2.msra.mxu0 %v1606
  %1754 = vmatprep.subr.mxu0 0.0
  %1755 = vmatpush2.msra.mxu0 %v1605
  %1756 = vmatprep.mubr.f32.mxu0 %v1584
  %1757 = vmatmul.mubr.f32.gmra.mxu0 %v1583
  %v1758 = vpop.f32.mrf.mxu0
  %v1759 = vadd.f32 %v1690, %v1758
  %v1760 = vpop.f32.mrf.mxu0
  %1761 = vdwg.mxu0
  %1762 = vmatprep.subr.mxu0 0.0
  %1763 = vmatpush1.msra.mxu0 %v1636
  %1764 = vmatprep.subr.mxu0 0.0
  %1765 = vmatpush1.msra.mxu0 %v1635
  %1766 = vmatprep.subr.mxu0 0.0
  %1767 = vmatpush1.msra.mxu0 %v1634
  %1768 = vmatprep.subr.mxu0 0.0
  %1769 = vmatpush1.msra.mxu0 %v1633
  %1770 = vmatprep.subr.mxu0 0.0
  %1771 = vmatpush1.msra.mxu0 %v1632
  %1772 = vmatprep.subr.mxu0 0.0
  %1773 = vmatpush1.msra.mxu0 %v1631
  %1774 = vmatprep.subr.mxu0 0.0
  %1775 = vmatpush1.msra.mxu0 %v1630
  %1776 = vmatprep.subr.mxu0 0.0
  %1777 = vmatpush1.msra.mxu0 %v1629
  %1778 = vmatprep.subr.mxu0 0.0
  %1779 = vmatpush1.msra.mxu0 %v1628
  %1780 = vmatprep.subr.mxu0 0.0
  %1781 = vmatpush1.msra.mxu0 %v1627
  %1782 = vmatprep.subr.mxu0 0.0
  %1783 = vmatpush1.msra.mxu0 %v1626
  %1784 = vmatprep.subr.mxu0 0.0
  %1785 = vmatpush1.msra.mxu0 %v1625
  %1786 = vmatprep.subr.mxu0 0.0
  %1787 = vmatpush1.msra.mxu0 %v1624
  %1788 = vmatprep.subr.mxu0 0.0
  %1789 = vmatpush1.msra.mxu0 %v1623
  %1790 = vmatprep.subr.mxu0 0.0
  %1791 = vmatpush1.msra.mxu0 %v1622
  %1792 = vmatprep.subr.mxu0 0.0
  %1793 = vmatpush1.msra.mxu0 %v1621
  %1794 = vmatprep.subr.mxu0 0.0
  %1795 = vmatpush2.msra.mxu0 %v1652
  %1796 = vmatprep.subr.mxu0 0.0
  %1797 = vmatpush2.msra.mxu0 %v1651
  %1798 = vmatprep.subr.mxu0 0.0
  %1799 = vmatpush2.msra.mxu0 %v1650
  %1800 = vmatprep.subr.mxu0 0.0
  %1801 = vmatpush2.msra.mxu0 %v1649
  %1802 = vmatprep.subr.mxu0 0.0
  %1803 = vmatpush2.msra.mxu0 %v1648
  %1804 = vmatprep.subr.mxu0 0.0
  %1805 = vmatpush2.msra.mxu0 %v1647
  %1806 = vmatprep.subr.mxu0 0.0
  %1807 = vmatpush2.msra.mxu0 %v1646
  %1808 = vmatprep.subr.mxu0 0.0
  %1809 = vmatpush2.msra.mxu0 %v1645
  %1810 = vmatprep.subr.mxu0 0.0
  %1811 = vmatpush2.msra.mxu0 %v1644
  %1812 = vmatprep.subr.mxu0 0.0
  %1813 = vmatpush2.msra.mxu0 %v1643
  %1814 = vmatprep.subr.mxu0 0.0
  %1815 = vmatpush2.msra.mxu0 %v1642
  %1816 = vmatprep.subr.mxu0 0.0
  %1817 = vmatpush2.msra.mxu0 %v1641
  %1818 = vmatprep.subr.mxu0 0.0
  %1819 = vmatpush2.msra.mxu0 %v1640
  %1820 = vmatprep.subr.mxu0 0.0
  %1821 = vmatpush2.msra.mxu0 %v1639
  %1822 = vmatprep.subr.mxu0 0.0
  %1823 = vmatpush2.msra.mxu0 %v1638
  %1824 = vmatprep.subr.mxu0 0.0
  %1825 = vmatpush2.msra.mxu0 %v1637
  %1826 = vmatprep.mubr.f32.mxu0 %v1586
  %1827 = vmatmul.mubr.f32.gmra.mxu0 %v1585
  %v1828 = vpop.f32.mrf.mxu0
  %v1829 = vadd.f32 %v1759, %v1828
  %v1830 = vpop.f32.mrf.mxu0
  %1831 = vdwg.mxu0
  %1832 = vmatprep.subr.mxu0 0.0
  %1833 = vmatpush1.msra.mxu0 %v1668
  %1834 = vmatprep.subr.mxu0 0.0
  %1835 = vmatpush1.msra.mxu0 %v1667
  %1836 = vmatprep.subr.mxu0 0.0
  %1837 = vmatpush1.msra.mxu0 %v1666
  %1838 = vmatprep.subr.mxu0 0.0
  %1839 = vmatpush1.msra.mxu0 %v1665
  %1840 = vmatprep.subr.mxu0 0.0
  %1841 = vmatpush1.msra.mxu0 %v1664
  %1842 = vmatprep.subr.mxu0 0.0
  %1843 = vmatpush1.msra.mxu0 %v1663
  %1844 = vmatprep.subr.mxu0 0.0
  %1845 = vmatpush1.msra.mxu0 %v1662
  %1846 = vmatprep.subr.mxu0 0.0
  %1847 = vmatpush1.msra.mxu0 %v1661
  %1848 = vmatprep.subr.mxu0 0.0
  %1849 = vmatpush1.msra.mxu0 %v1660
  %1850 = vmatprep.subr.mxu0 0.0
  %1851 = vmatpush1.msra.mxu0 %v1659
  %1852 = vmatprep.subr.mxu0 0.0
  %1853 = vmatpush1.msra.mxu0 %v1658
  %1854 = vmatprep.subr.mxu0 0.0
  %1855 = vmatpush1.msra.mxu0 %v1657
  %1856 = vmatprep.subr.mxu0 0.0
  %1857 = vmatpush1.msra.mxu0 %v1656
  %1858 = vmatprep.subr.mxu0 0.0
  %1859 = vmatpush1.msra.mxu0 %v1655
  %1860 = vmatprep.subr.mxu0 0.0
  %1861 = vmatpush1.msra.mxu0 %v1654
  %1862 = vmatprep.subr.mxu0 0.0
  %1863 = vmatpush1.msra.mxu0 %v1653
  %1864 = vmatprep.subr.mxu0 0.0
  %1865 = vmatpush2.msra.mxu0 %v1684
  %1866 = vmatprep.subr.mxu0 0.0
  %1867 = vmatpush2.msra.mxu0 %v1683
  %1868 = vmatprep.subr.mxu0 0.0
  %1869 = vmatpush2.msra.mxu0 %v1682
  %1870 = vmatprep.subr.mxu0 0.0
  %1871 = vmatpush2.msra.mxu0 %v1681
  %1872 = vmatprep.subr.mxu0 0.0
  %1873 = vmatpush2.msra.mxu0 %v1680
  %1874 = vmatprep.subr.mxu0 0.0
  %1875 = vmatpush2.msra.mxu0 %v1679
  %1876 = vmatprep.subr.mxu0 0.0
  %1877 = vmatpush2.msra.mxu0 %v1678
  %1878 = vmatprep.subr.mxu0 0.0
  %1879 = vmatpush2.msra.mxu0 %v1677
  %1880 = vmatprep.subr.mxu0 0.0
  %1881 = vmatpush2.msra.mxu0 %v1676
  %1882 = vmatprep.subr.mxu0 0.0
  %1883 = vmatpush2.msra.mxu0 %v1675
  %1884 = vmatprep.subr.mxu0 0.0
  %1885 = vmatpush2.msra.mxu0 %v1674
  %1886 = vmatprep.subr.mxu0 0.0
  %1887 = vmatpush2.msra.mxu0 %v1673
  %1888 = vmatprep.subr.mxu0 0.0
  %1889 = vmatpush2.msra.mxu0 %v1672
  %1890 = vmatprep.subr.mxu0 0.0
  %1891 = vmatpush2.msra.mxu0 %v1671
  %1892 = vmatprep.subr.mxu0 0.0
  %1893 = vmatpush2.msra.mxu0 %v1670
  %1894 = vmatprep.subr.mxu0 0.0
  %1895 = vmatpush2.msra.mxu0 %v1669
  %1896 = vmatprep.mubr.f32.mxu0 %v1588
  %1897 = vmatmul.mubr.f32.gmra.mxu0 %v1587
  %v1898 = vpop.f32.mrf.mxu0
  %v1899 = vadd.f32 %v1829, %v1898
  %v1900 = vpop.f32.mrf.mxu0
  %1901 = vdwg.mxu0
  %v1902 = vsub.f32 0.0, %v1899
  %v1903 = vmul.f32 %v1902, 1.442695
  %v1904 = vpow.pop %v1903
  %v1905 = vadd.f32 %v1904, 1.0
  %v1906 = vrcp.pop %v1905
  %vm1907 = vcmask 261120
  %1908 = vst.msk [vmem:[%s7] sm:$0xff] %vm1907, %v1906
  // Predicated region
  $region30: #{encoder_forward.1} parent=0 // pred_check
    _
  $region31: #{encoder_forward.1} parent=0 // pred_check_branch
    %1910 = sbr.rel (0) target = $region33
  $region32: #{encoder_forward.1} parent=0 // pred_region
    _
  $region33: #{encoder_forward.1} parent=0 // pred_fallthru
    _
  // Predicated region
  $region34: #{encoder_forward.1} parent=0 // pred_check
    _
  $region35: #{encoder_forward.1} parent=0 // pred_check_branch
    %1912 = sbr.rel (0) target = $region37
  $region36: #{encoder_forward.1} parent=0 // pred_region
    _
  $region37: #{encoder_forward.1} parent=0 // pred_fallthru
    _

</llo_original>
